<compile_context>
chip_gen: v7x
topology: tpu7x:2x2x1
jax: 0.10.0
libtpu: 0.0.40
codegen_flags: <defaults>
</compile_context>

<pallas_src>
import functools
import math

import jax
import jax.numpy as jnp
from jax.experimental import pallas as pl
from jax.experimental.pallas import tpu as pltpu


# ----------------------------------------------------------------------------
# In-kernel helpers
# ----------------------------------------------------------------------------
def _rms_norm(x, w_2d, eps):
    # LlamaRMSNorm: x * rsqrt(mean(x^2) + eps) * weight
    var = jnp.mean(x * x, axis=-1, keepdims=True)
    return x * jax.lax.rsqrt(var + eps) * w_2d


def _rope(t, cos, sin_hi, sin_lo, head_dim):
    """rotate-half RoPE applied per head block on a head-concatenated [L, H] tensor.

    The rotate_half sign and the half-block selection are folded into the
    host-precomputed sin tables (sin_hi nonzero on the second half of each head
    block, sin_lo = -sin on the first half), so the kernel only does two lane
    rolls (XLU) and a few VPU multiply/adds -- no per-call iota/where/sign.
    """
    h_total = t.shape[-1]
    rot_hi = pltpu.roll(t, shift=head_dim // 2, axis=1)             # t[j - D/2]
    rot_lo = pltpu.roll(t, shift=h_total - head_dim // 2, axis=1)   # t[j + D/2]
    return t * cos + rot_hi * sin_hi + rot_lo * sin_lo


def _split_heads(t, num_heads, head_dim):
    # [L, H] -> [num_heads, L, head_dim] via static lane slices.
    return jnp.stack(
        [t[:, h * head_dim:(h + 1) * head_dim] for h in range(num_heads)],
        axis=0)


# ----------------------------------------------------------------------------
# Fused decoder-layer kernel.  Grid = (batch, query_tiles); K/V side sees the
# full sequence, the query side sees one tile of rows.
# ----------------------------------------------------------------------------
def decoder_layer_kernel(
    xq_ref, xf_ref, bbq_ref, bbf_ref,
    cosq_ref, sinhiq_ref, sinloq_ref,
    cosf_ref, sinhif_ref, sinlof_ref,
    ln_in_ref, wq_ref, wkv_ref, wsq_ref, wsk_ref, wo_ref,
    ln_post_ref, wgu_ref, wdn_ref,
    out_ref,
    *, num_heads, head_dim, eps, lam_ts, lam_st, lam_ss,
):
    f32 = jnp.float32
    bf16 = jnp.bfloat16

    xq = xq_ref[0]            # [TQ, H] query-tile rows (f32)
    xf = xf_ref[0]            # [S,  H] full sequence   (f32)
    bbq = bbq_ref[0]          # [TQ, H]
    bbf = bbf_ref[0]          # [S,  H]

    tq, hid = xq.shape
    seq = xf.shape[0]
    inter = wdn_ref.shape[0]
    scale = 1.0 / math.sqrt(head_dim)

    ln_in = ln_in_ref[...]    # [1, H]

    # ---- input RMSNorm + fused full-width projections (bf16 operands) ------
    hq = _rms_norm(xq, ln_in, eps).astype(bf16)
    hf = _rms_norm(xf, ln_in, eps).astype(bf16)

    q = jnp.dot(hq, wq_ref[...], preferred_element_type=f32)            # [TQ, H]
    qs = jnp.dot(bbq.astype(bf16), wsq_ref[...],
                 preferred_element_type=f32)                            # [TQ, H]
    kv = jnp.dot(hf, wkv_ref[...], preferred_element_type=f32)          # [S, 2H]
    k = kv[:, :hid]
    v = kv[:, hid:]
    ks = jnp.dot(bbf.astype(bf16), wsk_ref[...],
                 preferred_element_type=f32)                            # [S, H]

    # ---- RoPE ---------------------------------------------------------------
    q = _rope(q, cosq_ref[...], sinhiq_ref[...], sinloq_ref[...], head_dim)
    qs = _rope(qs, cosq_ref[...], sinhiq_ref[...], sinloq_ref[...], head_dim)
    k = _rope(k, cosf_ref[...], sinhif_ref[...], sinlof_ref[...], head_dim)
    ks = _rope(ks, cosf_ref[...], sinhif_ref[...], sinlof_ref[...], head_dim)

    # ---- fused disentangled scores ------------------------------------------
    #   QK^T + l_ts*Q Ks^T + l_st*Qs K^T + l_ss*Qs Ks^T
    #     = [Q | Qs] @ [K + l_ts*Ks | l_st*K + l_ss*Ks]^T
    # One batched MXU matmul with contraction 2*head_dim; the 1/sqrt(D) scale
    # is folded into the Q operand.
    k_txt = k + lam_ts * ks
    k_sp = lam_st * k + lam_ss * ks

    q_cat = jnp.concatenate(
        [_split_heads(q * scale, num_heads, head_dim),
         _split_heads(qs * scale, num_heads, head_dim)],
        axis=-1).astype(bf16)                                           # [NH,TQ,2D]
    k_cat = jnp.concatenate(
        [_split_heads(k_txt, num_heads, head_dim),
         _split_heads(k_sp, num_heads, head_dim)],
        axis=-1).astype(bf16)                                           # [NH,S,2D]
    v_h = _split_heads(v, num_heads, head_dim).astype(bf16)             # [NH,S,D]

    scores = jnp.einsum("nqd,nkd->nqk", q_cat, k_cat,
                        preferred_element_type=f32)                     # [NH,TQ,S]

    # causal mask; query rows are offset by the query-tile index (no KV cache).
    q_start = pl.program_id(1) * tq
    q_pos = q_start + jax.lax.broadcasted_iota(jnp.int32, (tq, seq), 0)
    k_pos = jax.lax.broadcasted_iota(jnp.int32, (tq, seq), 1)
    neg = jnp.float32(jnp.finfo(jnp.float32).min / 2)   # dtype-aware mask value
    scores = jnp.where((k_pos <= q_pos)[None], scores, neg)

    # softmax (EUP exp + approximate reciprocal instead of a VPU divide)
    m = jnp.max(scores, axis=-1, keepdims=True)
    p = jnp.exp(scores - m)
    p = p * pl.reciprocal(jnp.sum(p, axis=-1, keepdims=True), approx=True)

    o_h = jnp.einsum("nqk,nkd->nqd", p.astype(bf16), v_h,
                     preferred_element_type=f32)                        # [NH,TQ,D]

    # merge heads back onto lanes -> single full-width o_proj matmul.
    o = jnp.concatenate([o_h[h] for h in range(num_heads)], axis=-1)    # [TQ, H]
    attn = jnp.dot(o.astype(bf16), wo_ref[...], preferred_element_type=f32)

    h1 = xq + attn

    # ---- post-attention RMSNorm + SwiGLU MLP (fused gate|up matmul) ---------
    h2 = _rms_norm(h1, ln_post_ref[...], eps).astype(bf16)
    gu = jnp.dot(h2, wgu_ref[...], preferred_element_type=f32)          # [TQ,2I]
    gate = gu[:, :inter]
    up = gu[:, inter:]
    act = gate * jax.nn.sigmoid(gate)                                   # SiLU
    mlp = jnp.dot((act * up).astype(bf16), wdn_ref[...],
                  preferred_element_type=f32)

    out_ref[0] = (h1 + mlp).astype(out_ref.dtype)


# ----------------------------------------------------------------------------
# Wrapper
# ----------------------------------------------------------------------------
def docllm_decoder_layer(hidden_states, bbox_emb, params, *, num_heads,
                         eps=1e-6, lambdas=(1.0, 1.0, 1.0), q_tile=None):
    B, S, H = hidden_states.shape
    assert H % num_heads == 0
    head_dim = H // num_heads
    if q_tile is None:
        q_tile = S if S <= 256 else 256
    assert S % q_tile == 0
    nq = S // q_tile
    inter = params["wdn"].shape[0]
    lam_ts, lam_st, lam_ss = lambdas

    kernel = functools.partial(
        decoder_layer_kernel, num_heads=num_heads, head_dim=head_dim,
        eps=eps, lam_ts=lam_ts, lam_st=lam_st, lam_ss=lam_ss)

    btile = lambda b, qi: (b, qi, 0)   # per-batch, per-query-tile
    bfull = lambda b, qi: (b, 0, 0)    # per-batch, full sequence (resident)
    qrows = lambda b, qi: (qi, 0)      # query-tile rows of RoPE tables
    const = lambda b, qi: (0, 0)       # broadcast weights (constant block)

    # NOTE: constant-index weight blocks stay resident across the grid; a
    # further VMEM saving at real sizes is pipeline_mode=pl.Buffered(1) or an
    # inter-dim reduction grid axis for the MLP weights.
    in_specs = [
        pl.BlockSpec((1, q_tile, H), btile),    # hidden_states (query rows)
        pl.BlockSpec((1, S, H), bfull),         # hidden_states (K/V side)
        pl.BlockSpec((1, q_tile, H), btile),    # bbox embeddings (query rows)
        pl.BlockSpec((1, S, H), bfull),         # bbox embeddings (K side)
        pl.BlockSpec((q_tile, H), qrows),       # cos    (query rows)
        pl.BlockSpec((q_tile, H), qrows),       # sin_hi (query rows)
        pl.BlockSpec((q_tile, H), qrows),       # sin_lo (query rows)
        pl.BlockSpec((S, H), const),            # cos    (full)
        pl.BlockSpec((S, H), const),            # sin_hi (full)
        pl.BlockSpec((S, H), const),            # sin_lo (full)
        pl.BlockSpec((1, H), const),            # input_layernorm weight
        pl.BlockSpec((H, H), const),            # W_q
        pl.BlockSpec((H, 2 * H), const),        # W_kv   (concat K|V)
        pl.BlockSpec((H, H), const),            # W_spatial_q
        pl.BlockSpec((H, H), const),            # W_spatial_k
        pl.BlockSpec((H, H), const),            # W_o
        pl.BlockSpec((1, H), const),            # post_attention_layernorm weight
        pl.BlockSpec((H, 2 * inter), const),    # W_gate|up
        pl.BlockSpec((inter, H), const),        # W_down
    ]

    out = pl.pallas_call(
        kernel,
        out_shape=jax.ShapeDtypeStruct((B, S, H), jnp.float32),
        grid=(B, nq),
        in_specs=in_specs,
        out_specs=pl.BlockSpec((1, q_tile, H), btile),
        compiler_params=pltpu.CompilerParams(
            dimension_semantics=("parallel", "parallel"),
            vmem_limit_bytes=48 * 1024 * 1024),
    )(hidden_states, hidden_states, bbox_emb, bbox_emb,
      params["cos"], params["sin_hi"], params["sin_lo"],
      params["cos"], params["sin_hi"], params["sin_lo"],
      params["ln_in"], params["wq"], params["wkv"], params["wsq"],
      params["wsk"], params["wo"], params["ln_post"], params["wgu"],
      params["wdn"])

    # Matches the PyTorch forward return signature:
    # (hidden_states, self_attn_weights, present_key_value, spatial_present_kv)
    return out, None, None, None


# ----------------------------------------------------------------------------
# Host-side parameter construction
# ----------------------------------------------------------------------------
def make_rope_tables(seq, head_dim, num_heads, theta=10000.0):
    inv_freq = 1.0 / (theta ** (jnp.arange(0, head_dim, 2, dtype=jnp.float32)
                                / head_dim))
    pos = jnp.arange(seq, dtype=jnp.float32)
    freqs = pos[:, None] * inv_freq[None, :]
    emb = jnp.concatenate([freqs, freqs], axis=-1)     # [S, D]
    cos = jnp.cos(emb)
    sin = jnp.sin(emb)
    lane = jnp.arange(head_dim)
    hi = (lane >= head_dim // 2).astype(jnp.float32)   # second half of head block
    lo = (lane < head_dim // 2).astype(jnp.float32)    # first half of head block
    return {
        "cos": jnp.tile(cos, (1, num_heads)),          # [S, H]
        "sin_hi": jnp.tile(sin * hi, (1, num_heads)),  # +sin on second half
        "sin_lo": jnp.tile(-sin * lo, (1, num_heads)),  # -sin on first half
        "cos_base": cos, "sin_base": sin,              # [S, D] for the reference
    }


def init_params(key, hidden, inter):
    ks = jax.random.split(key, 11)

    def proj(k, din, dout):
        return jax.random.normal(k, (din, dout), jnp.float32) / math.sqrt(din)

    return {
        "ln_in": 1.0 + 0.1 * jax.random.normal(ks[0], (1, hidden), jnp.float32),
        "ln_post": 1.0 + 0.1 * jax.random.normal(ks[1], (1, hidden), jnp.float32),
        "Wq": proj(ks[2], hidden, hidden),
        "Wk": proj(ks[3], hidden, hidden),
        "Wv": proj(ks[4], hidden, hidden),
        "Wsq": proj(ks[5], hidden, hidden),   # spatial (bbox) query proj
        "Wsk": proj(ks[6], hidden, hidden),   # spatial (bbox) key proj
        "Wo": proj(ks[7], hidden, hidden),
        "Wg": proj(ks[8], hidden, inter),
        "Wu": proj(ks[9], hidden, inter),
        "Wd": proj(ks[10], inter, hidden),
    }


def pack_kernel_params(p, rope):
    """Fused / bf16 weight layout consumed by the Pallas kernel."""
    bf16 = jnp.bfloat16
    return {
        "ln_in": p["ln_in"], "ln_post": p["ln_post"],
        "wq": p["Wq"].astype(bf16),
        "wkv": jnp.concatenate([p["Wk"], p["Wv"]], axis=1).astype(bf16),
        "wsq": p["Wsq"].astype(bf16),
        "wsk": p["Wsk"].astype(bf16),
        "wo": p["Wo"].astype(bf16),
        "wgu": jnp.concatenate([p["Wg"], p["Wu"]], axis=1).astype(bf16),
        "wdn": p["Wd"].astype(bf16),
        "cos": rope["cos"], "sin_hi": rope["sin_hi"], "sin_lo": rope["sin_lo"],
    }


# ----------------------------------------------------------------------------
# Pure-JAX reference (mirrors the kernel's bf16 matmul-operand precision so the
# comparison isolates fusion/tiling logic rather than dtype differences).
# ----------------------------------------------------------------------------
def reference(hidden, bbox, p, rope, *, num_heads, eps, lambdas):
    B, S, H = hidden.shape
    D = H // num_heads
    lam_ts, lam_st, lam_ss = lambdas
    cos, sin = rope["cos_base"], rope["sin_base"]
    bf = lambda t: t.astype(jnp.bfloat16)

    def mm(a, b):
        return jnp.einsum("...ij,jk->...ik", bf(a), bf(b),
                          preferred_element_type=jnp.float32)

    def rms(x, w):
        var = jnp.mean(x * x, axis=-1, keepdims=True)
        return x * jax.lax.rsqrt(var + eps) * w.reshape(-1)

    def heads(y):  # [B,S,H] -> [B,NH,S,D]
        return y.reshape(B, S, num_heads, D).transpose(0, 2, 1, 3)

    def rope_fn(t):  # [B,NH,S,D]
        rot = jnp.concatenate([-t[..., D // 2:], t[..., :D // 2]], axis=-1)
        return t * cos[None, None] + rot * sin[None, None]

    h = rms(hidden, p["ln_in"])
    q = rope_fn(heads(mm(h, p["Wq"])))
    k = rope_fn(heads(mm(h, p["Wk"])))
    v = heads(mm(h, p["Wv"]))
    qs = rope_fn(heads(mm(bbox, p["Wsq"])))
    ks = rope_fn(heads(mm(bbox, p["Wsk"])))

    qb, kb, qsb, ksb = bf(q), bf(k), bf(qs), bf(ks)
    f32 = jnp.float32
    scores = (jnp.einsum("bnqd,bnkd->bnqk", qb, kb, preferred_element_type=f32)
              + lam_ts * jnp.einsum("bnqd,bnkd->bnqk", qb, ksb,
                                    preferred_element_type=f32)
              + lam_st * jnp.einsum("bnqd,bnkd->bnqk", qsb, kb,
                                    preferred_element_type=f32)
              + lam_ss * jnp.einsum("bnqd,bnkd->bnqk", qsb, ksb,
                                    preferred_element_type=f32)) / math.sqrt(D)
    causal = jnp.tril(jnp.ones((S, S), bool))
    scores = jnp.where(causal[None, None], scores, -1e30)
    probs = jax.nn.softmax(scores, axis=-1)
    o = jnp.einsum("bnqk,bnkd->bnqd", bf(probs), bf(v),
                   preferred_element_type=f32)
    o = o.transpose(0, 2, 1, 3).reshape(B, S, H)
    attn = mm(o, p["Wo"])
    h1 = hidden + attn
    h2 = rms(h1, p["ln_post"])
    mlp = mm(jax.nn.silu(mm(h2, p["Wg"])) * mm(h2, p["Wu"]), p["Wd"])
    return h1 + mlp


if __name__ == "__main__":
    B, S, H = 2, 8, 32
    NUM_HEADS, INTER = 4, 64
    EPS = 1e-6
    LAMBDAS = (1.0, 1.0, 1.0)   # (lambda_ts, lambda_st, lambda_ss)

    key = jax.random.PRNGKey(0)
    k_h, k_b, k_p = jax.random.split(key, 3)
    hidden = jax.random.normal(k_h, (B, S, H), jnp.float32)
    bbox = jax.random.normal(k_b, (B, S, H), jnp.float32)

    master = init_params(k_p, H, INTER)
    rope = make_rope_tables(S, H // NUM_HEADS, NUM_HEADS)
    kparams = pack_kernel_params(master, rope)

    out, attn_w, kv, skv = docllm_decoder_layer(
        hidden, bbox, kparams, num_heads=NUM_HEADS, eps=EPS, lambdas=LAMBDAS)
    out = jax.block_until_ready(out)

    ref = reference(hidden, bbox, master, rope,
                    num_heads=NUM_HEADS, eps=EPS, lambdas=LAMBDAS)

    assert out.shape == (B, S, H)
    assert bool(jnp.all(jnp.isfinite(out)))
    max_err = float(jnp.max(jnp.abs(out - ref)))
    mean_err = float(jnp.mean(jnp.abs(out - ref)))
    # bf16 MXU operands + different fusion grouping -> bf16-level tolerance.
    assert max_err < 1.5e-1 and mean_err < 2e-2, (max_err, mean_err)
    print("KERNEL_OK")
</pallas_src>

<mosaic_0001>
module attributes {stable_mosaic.version = 11 : i64} {
  func.func @decoder_layer_kernel(%arg0: i32, %arg1: i32, %arg2: memref<1x8x32xf32, #tpu.memory_space<vmem>>, %arg3: memref<1x8x32xf32, #tpu.memory_space<vmem>>, %arg4: memref<1x8x32xf32, #tpu.memory_space<vmem>>, %arg5: memref<1x8x32xf32, #tpu.memory_space<vmem>>, %arg6: memref<8x32xf32, #tpu.memory_space<vmem>>, %arg7: memref<8x32xf32, #tpu.memory_space<vmem>>, %arg8: memref<8x32xf32, #tpu.memory_space<vmem>>, %arg9: memref<8x32xf32, #tpu.memory_space<vmem>>, %arg10: memref<8x32xf32, #tpu.memory_space<vmem>>, %arg11: memref<8x32xf32, #tpu.memory_space<vmem>>, %arg12: memref<1x32xf32, #tpu.memory_space<vmem>>, %arg13: memref<32x32xbf16, #tpu.memory_space<vmem>>, %arg14: memref<32x64xbf16, #tpu.memory_space<vmem>>, %arg15: memref<32x32xbf16, #tpu.memory_space<vmem>>, %arg16: memref<32x32xbf16, #tpu.memory_space<vmem>>, %arg17: memref<32x32xbf16, #tpu.memory_space<vmem>>, %arg18: memref<1x32xf32, #tpu.memory_space<vmem>>, %arg19: memref<32x128xbf16, #tpu.memory_space<vmem>>, %arg20: memref<64x32xbf16, #tpu.memory_space<vmem>>, %arg21: memref<1x8x32xf32, #tpu.memory_space<vmem>>) attributes {dimension_semantics = [#tpu.dimension_semantics<parallel>, #tpu.dimension_semantics<parallel>], iteration_bounds = array<i64: 2, 1>, scalar_prefetch = 0 : i64, scratch_operands = 0 : i64, tpu.core_type = #tpu.core_type<tc>, window_params = [{transform_indices = @transform_0, window_bounds = array<i64: 1, 8, 32>}, {transform_indices = @transform_1, window_bounds = array<i64: 1, 8, 32>}, {transform_indices = @transform_2, window_bounds = array<i64: 1, 8, 32>}, {transform_indices = @transform_3, window_bounds = array<i64: 1, 8, 32>}, {transform_indices = @transform_4, window_bounds = array<i64: 8, 32>}, {transform_indices = @transform_5, window_bounds = array<i64: 8, 32>}, {transform_indices = @transform_6, window_bounds = array<i64: 8, 32>}, {pipeline_mode = #tpu.pipeline_mode<synchronous>, transform_indices = @transform_7, window_bounds = array<i64: 8, 32>}, {pipeline_mode = #tpu.pipeline_mode<synchronous>, transform_indices = @transform_8, window_bounds = array<i64: 8, 32>}, {pipeline_mode = #tpu.pipeline_mode<synchronous>, transform_indices = @transform_9, window_bounds = array<i64: 8, 32>}, {pipeline_mode = #tpu.pipeline_mode<synchronous>, transform_indices = @transform_10, window_bounds = array<i64: 1, 32>}, {pipeline_mode = #tpu.pipeline_mode<synchronous>, transform_indices = @transform_11, window_bounds = array<i64: 32, 32>}, {pipeline_mode = #tpu.pipeline_mode<synchronous>, transform_indices = @transform_12, window_bounds = array<i64: 32, 64>}, {pipeline_mode = #tpu.pipeline_mode<synchronous>, transform_indices = @transform_13, window_bounds = array<i64: 32, 32>}, {pipeline_mode = #tpu.pipeline_mode<synchronous>, transform_indices = @transform_14, window_bounds = array<i64: 32, 32>}, {pipeline_mode = #tpu.pipeline_mode<synchronous>, transform_indices = @transform_15, window_bounds = array<i64: 32, 32>}, {pipeline_mode = #tpu.pipeline_mode<synchronous>, transform_indices = @transform_16, window_bounds = array<i64: 1, 32>}, {pipeline_mode = #tpu.pipeline_mode<synchronous>, transform_indices = @transform_17, window_bounds = array<i64: 32, 128>}, {pipeline_mode = #tpu.pipeline_mode<synchronous>, transform_indices = @transform_18, window_bounds = array<i64: 64, 32>}, {transform_indices = @transform_19, window_bounds = array<i64: 1, 8, 32>}]} {
    %c0 = arith.constant 0 : index
    %c0_0 = arith.constant 0 : index
    %c0_1 = arith.constant 0 : index
    %0 = vector.load %arg2[%c0, %c0_0, %c0_1] : memref<1x8x32xf32, #tpu.memory_space<vmem>>, vector<1x8x32xf32>
    %1 = vector.shape_cast %0 : vector<1x8x32xf32> to vector<8x32xf32>
    %c0_2 = arith.constant 0 : index
    %c0_3 = arith.constant 0 : index
    %c0_4 = arith.constant 0 : index
    %2 = vector.load %arg3[%c0_2, %c0_3, %c0_4] : memref<1x8x32xf32, #tpu.memory_space<vmem>>, vector<1x8x32xf32>
    %3 = vector.shape_cast %2 : vector<1x8x32xf32> to vector<8x32xf32>
    %c0_5 = arith.constant 0 : index
    %c0_6 = arith.constant 0 : index
    %c0_7 = arith.constant 0 : index
    %4 = vector.load %arg4[%c0_5, %c0_6, %c0_7] : memref<1x8x32xf32, #tpu.memory_space<vmem>>, vector<1x8x32xf32>
    %5 = vector.shape_cast %4 : vector<1x8x32xf32> to vector<8x32xf32>
    %c0_8 = arith.constant 0 : index
    %c0_9 = arith.constant 0 : index
    %c0_10 = arith.constant 0 : index
    %6 = vector.load %arg5[%c0_8, %c0_9, %c0_10] : memref<1x8x32xf32, #tpu.memory_space<vmem>>, vector<1x8x32xf32>
    %7 = vector.shape_cast %6 : vector<1x8x32xf32> to vector<8x32xf32>
    %c0_11 = arith.constant 0 : index
    %c0_12 = arith.constant 0 : index
    %8 = vector.load %arg12[%c0_11, %c0_12] : memref<1x32xf32, #tpu.memory_space<vmem>>, vector<1x32xf32>
    %9 = arith.mulf %1, %1 : vector<8x32xf32>
    %cst = arith.constant dense<0.000000e+00> : vector<8xf32>
    %10 = vector.multi_reduction <add>, %9, %cst [1] : vector<8x32xf32> to vector<8xf32>
    %11 = vector.shape_cast %10 : vector<8xf32> to vector<8x1xf32>
    %cst_13 = arith.constant 3.200000e+01 : f32
    %12 = vector.broadcast %cst_13 : f32 to vector<8x1xf32>
    %13 = arith.divf %11, %12 : vector<8x1xf32>
    %cst_14 = arith.constant 9.99999997E-7 : f32
    %14 = vector.broadcast %cst_14 : f32 to vector<8x1xf32>
    %15 = arith.addf %13, %14 : vector<8x1xf32>
    %16 = math.rsqrt %15 : vector<8x1xf32>
    %17 = vector.broadcast %16 : vector<8x1xf32> to vector<8x32xf32>
    %18 = arith.mulf %1, %17 : vector<8x32xf32>
    %19 = vector.broadcast %8 : vector<1x32xf32> to vector<8x32xf32>
    %20 = arith.mulf %18, %19 : vector<8x32xf32>
    %21 = arith.truncf %20 : vector<8x32xf32> to vector<8x32xbf16>
    %22 = arith.mulf %3, %3 : vector<8x32xf32>
    %cst_15 = arith.constant dense<0.000000e+00> : vector<8xf32>
    %23 = vector.multi_reduction <add>, %22, %cst_15 [1] : vector<8x32xf32> to vector<8xf32>
    %24 = vector.shape_cast %23 : vector<8xf32> to vector<8x1xf32>
    %cst_16 = arith.constant 3.200000e+01 : f32
    %25 = vector.broadcast %cst_16 : f32 to vector<8x1xf32>
    %26 = arith.divf %24, %25 : vector<8x1xf32>
    %cst_17 = arith.constant 9.99999997E-7 : f32
    %27 = vector.broadcast %cst_17 : f32 to vector<8x1xf32>
    %28 = arith.addf %26, %27 : vector<8x1xf32>
    %29 = math.rsqrt %28 : vector<8x1xf32>
    %30 = vector.broadcast %29 : vector<8x1xf32> to vector<8x32xf32>
    %31 = arith.mulf %3, %30 : vector<8x32xf32>
    %32 = vector.broadcast %8 : vector<1x32xf32> to vector<8x32xf32>
    %33 = arith.mulf %31, %32 : vector<8x32xf32>
    %34 = arith.truncf %33 : vector<8x32xf32> to vector<8x32xbf16>
    %c0_18 = arith.constant 0 : index
    %c0_19 = arith.constant 0 : index
    %35 = vector.load %arg13[%c0_18, %c0_19] : memref<32x32xbf16, #tpu.memory_space<vmem>>, vector<32x32xbf16>
    %cst_20 = arith.constant dense<0.000000e+00> : vector<8x32xf32>
    %36 = tpu.matmul %21, %35, %cst_20 {dimension_numbers = #tpu.dot_dimension_numbers<[1], [0], [0], [1], [0, 0, 1, 1], [], []>} : vector<8x32xbf16>, vector<32x32xbf16>, vector<8x32xf32> -> vector<8x32xf32>
    %37 = arith.truncf %5 : vector<8x32xf32> to vector<8x32xbf16>
    %c0_21 = arith.constant 0 : index
    %c0_22 = arith.constant 0 : index
    %38 = vector.load %arg15[%c0_21, %c0_22] : memref<32x32xbf16, #tpu.memory_space<vmem>>, vector<32x32xbf16>
    %cst_23 = arith.constant dense<0.000000e+00> : vector<8x32xf32>
    %39 = tpu.matmul %37, %38, %cst_23 {dimension_numbers = #tpu.dot_dimension_numbers<[1], [0], [0], [1], [0, 0, 1, 1], [], []>} : vector<8x32xbf16>, vector<32x32xbf16>, vector<8x32xf32> -> vector<8x32xf32>
    %c0_24 = arith.constant 0 : index
    %c0_25 = arith.constant 0 : index
    %40 = vector.load %arg14[%c0_24, %c0_25] : memref<32x64xbf16, #tpu.memory_space<vmem>>, vector<32x64xbf16>
    %cst_26 = arith.constant dense<0.000000e+00> : vector<8x64xf32>
    %41 = tpu.matmul %34, %40, %cst_26 {dimension_numbers = #tpu.dot_dimension_numbers<[1], [0], [0], [1], [0, 0, 1, 1], [], []>} : vector<8x32xbf16>, vector<32x64xbf16>, vector<8x64xf32> -> vector<8x64xf32>
    %42 = vector.extract_strided_slice %41 {offsets = [0, 0], sizes = [8, 32], strides = [1, 1]} : vector<8x64xf32> to vector<8x32xf32>
    %43 = vector.extract_strided_slice %41 {offsets = [0, 32], sizes = [8, 32], strides = [1, 1]} : vector<8x64xf32> to vector<8x32xf32>
    %44 = arith.truncf %7 : vector<8x32xf32> to vector<8x32xbf16>
    %c0_27 = arith.constant 0 : index
    %c0_28 = arith.constant 0 : index
    %45 = vector.load %arg16[%c0_27, %c0_28] : memref<32x32xbf16, #tpu.memory_space<vmem>>, vector<32x32xbf16>
    %cst_29 = arith.constant dense<0.000000e+00> : vector<8x32xf32>
    %46 = tpu.matmul %44, %45, %cst_29 {dimension_numbers = #tpu.dot_dimension_numbers<[1], [0], [0], [1], [0, 0, 1, 1], [], []>} : vector<8x32xbf16>, vector<32x32xbf16>, vector<8x32xf32> -> vector<8x32xf32>
    %c0_30 = arith.constant 0 : index
    %c0_31 = arith.constant 0 : index
    %47 = vector.load %arg6[%c0_30, %c0_31] : memref<8x32xf32, #tpu.memory_space<vmem>>, vector<8x32xf32>
    %c0_32 = arith.constant 0 : index
    %c0_33 = arith.constant 0 : index
    %48 = vector.load %arg7[%c0_32, %c0_33] : memref<8x32xf32, #tpu.memory_space<vmem>>, vector<8x32xf32>
    %c0_34 = arith.constant 0 : index
    %c0_35 = arith.constant 0 : index
    %49 = vector.load %arg8[%c0_34, %c0_35] : memref<8x32xf32, #tpu.memory_space<vmem>>, vector<8x32xf32>
    %c4_i32 = arith.constant 4 : i32
    %50 = tpu.dynamic_rotate %36 by %c4_i32 dim 1 : vector<8x32xf32>, i32 -> vector<8x32xf32>
    %c28_i32 = arith.constant 28 : i32
    %51 = tpu.dynamic_rotate %36 by %c28_i32 dim 1 : vector<8x32xf32>, i32 -> vector<8x32xf32>
    %52 = arith.mulf %36, %47 : vector<8x32xf32>
    %53 = arith.mulf %50, %48 : vector<8x32xf32>
    %54 = arith.addf %52, %53 : vector<8x32xf32>
    %55 = arith.mulf %51, %49 : vector<8x32xf32>
    %56 = arith.addf %54, %55 : vector<8x32xf32>
    %c0_36 = arith.constant 0 : index
    %c0_37 = arith.constant 0 : index
    %57 = vector.load %arg6[%c0_36, %c0_37] : memref<8x32xf32, #tpu.memory_space<vmem>>, vector<8x32xf32>
    %c0_38 = arith.constant 0 : index
    %c0_39 = arith.constant 0 : index
    %58 = vector.load %arg7[%c0_38, %c0_39] : memref<8x32xf32, #tpu.memory_space<vmem>>, vector<8x32xf32>
    %c0_40 = arith.constant 0 : index
    %c0_41 = arith.constant 0 : index
    %59 = vector.load %arg8[%c0_40, %c0_41] : memref<8x32xf32, #tpu.memory_space<vmem>>, vector<8x32xf32>
    %c4_i32_42 = arith.constant 4 : i32
    %60 = tpu.dynamic_rotate %39 by %c4_i32_42 dim 1 : vector<8x32xf32>, i32 -> vector<8x32xf32>
    %c28_i32_43 = arith.constant 28 : i32
    %61 = tpu.dynamic_rotate %39 by %c28_i32_43 dim 1 : vector<8x32xf32>, i32 -> vector<8x32xf32>
    %62 = arith.mulf %39, %57 : vector<8x32xf32>
    %63 = arith.mulf %60, %58 : vector<8x32xf32>
    %64 = arith.addf %62, %63 : vector<8x32xf32>
    %65 = arith.mulf %61, %59 : vector<8x32xf32>
    %66 = arith.addf %64, %65 : vector<8x32xf32>
    %c0_44 = arith.constant 0 : index
    %c0_45 = arith.constant 0 : index
    %67 = vector.load %arg9[%c0_44, %c0_45] : memref<8x32xf32, #tpu.memory_space<vmem>>, vector<8x32xf32>
    %c0_46 = arith.constant 0 : index
    %c0_47 = arith.constant 0 : index
    %68 = vector.load %arg10[%c0_46, %c0_47] : memref<8x32xf32, #tpu.memory_space<vmem>>, vector<8x32xf32>
    %c0_48 = arith.constant 0 : index
    %c0_49 = arith.constant 0 : index
    %69 = vector.load %arg11[%c0_48, %c0_49] : memref<8x32xf32, #tpu.memory_space<vmem>>, vector<8x32xf32>
    %c4_i32_50 = arith.constant 4 : i32
    %70 = tpu.dynamic_rotate %42 by %c4_i32_50 dim 1 : vector<8x32xf32>, i32 -> vector<8x32xf32>
    %c28_i32_51 = arith.constant 28 : i32
    %71 = tpu.dynamic_rotate %42 by %c28_i32_51 dim 1 : vector<8x32xf32>, i32 -> vector<8x32xf32>
    %72 = arith.mulf %42, %67 : vector<8x32xf32>
    %73 = arith.mulf %70, %68 : vector<8x32xf32>
    %74 = arith.addf %72, %73 : vector<8x32xf32>
    %75 = arith.mulf %71, %69 : vector<8x32xf32>
    %76 = arith.addf %74, %75 : vector<8x32xf32>
    %c0_52 = arith.constant 0 : index
    %c0_53 = arith.constant 0 : index
    %77 = vector.load %arg9[%c0_52, %c0_53] : memref<8x32xf32, #tpu.memory_space<vmem>>, vector<8x32xf32>
    %c0_54 = arith.constant 0 : index
    %c0_55 = arith.constant 0 : index
    %78 = vector.load %arg10[%c0_54, %c0_55] : memref<8x32xf32, #tpu.memory_space<vmem>>, vector<8x32xf32>
    %c0_56 = arith.constant 0 : index
    %c0_57 = arith.constant 0 : index
    %79 = vector.load %arg11[%c0_56, %c0_57] : memref<8x32xf32, #tpu.memory_space<vmem>>, vector<8x32xf32>
    %c4_i32_58 = arith.constant 4 : i32
    %80 = tpu.dynamic_rotate %46 by %c4_i32_58 dim 1 : vector<8x32xf32>, i32 -> vector<8x32xf32>
    %c28_i32_59 = arith.constant 28 : i32
    %81 = tpu.dynamic_rotate %46 by %c28_i32_59 dim 1 : vector<8x32xf32>, i32 -> vector<8x32xf32>
    %82 = arith.mulf %46, %77 : vector<8x32xf32>
    %83 = arith.mulf %80, %78 : vector<8x32xf32>
    %84 = arith.addf %82, %83 : vector<8x32xf32>
    %85 = arith.mulf %81, %79 : vector<8x32xf32>
    %86 = arith.addf %84, %85 : vector<8x32xf32>
    %cst_60 = arith.constant 1.000000e+00 : f32
    %87 = vector.broadcast %cst_60 : f32 to vector<8x32xf32>
    %88 = arith.mulf %87, %86 : vector<8x32xf32>
    %89 = arith.addf %76, %88 : vector<8x32xf32>
    %cst_61 = arith.constant 1.000000e+00 : f32
    %90 = vector.broadcast %cst_61 : f32 to vector<8x32xf32>
    %91 = arith.mulf %90, %76 : vector<8x32xf32>
    %cst_62 = arith.constant 1.000000e+00 : f32
    %92 = vector.broadcast %cst_62 : f32 to vector<8x32xf32>
    %93 = arith.mulf %92, %86 : vector<8x32xf32>
    %94 = arith.addf %91, %93 : vector<8x32xf32>
    %cst_63 = arith.constant 0.353553385 : f32
    %95 = vector.broadcast %cst_63 : f32 to vector<8x32xf32>
    %96 = arith.mulf %56, %95 : vector<8x32xf32>
    %97 = vector.extract_strided_slice %96 {offsets = [0, 0], sizes = [8, 8], strides = [1, 1]} : vector<8x32xf32> to vector<8x8xf32>
    %98 = vector.extract_strided_slice %96 {offsets = [0, 8], sizes = [8, 8], strides = [1, 1]} : vector<8x32xf32> to vector<8x8xf32>
    %99 = vector.extract_strided_slice %96 {offsets = [0, 16], sizes = [8, 8], strides = [1, 1]} : vector<8x32xf32> to vector<8x8xf32>
    %100 = vector.extract_strided_slice %96 {offsets = [0, 24], sizes = [8, 8], strides = [1, 1]} : vector<8x32xf32> to vector<8x8xf32>
    %101 = vector.shape_cast %97 : vector<8x8xf32> to vector<1x8x8xf32>
    %102 = vector.shape_cast %98 : vector<8x8xf32> to vector<1x8x8xf32>
    %103 = vector.shape_cast %99 : vector<8x8xf32> to vector<1x8x8xf32>
    %104 = vector.shape_cast %100 : vector<8x8xf32> to vector<1x8x8xf32>
    %105 = tpu.concatenate %101, %102, %103, %104 in 0 : vector<1x8x8xf32>, vector<1x8x8xf32>, vector<1x8x8xf32>, vector<1x8x8xf32> -> vector<4x8x8xf32>
    %cst_64 = arith.constant 0.353553385 : f32
    %106 = vector.broadcast %cst_64 : f32 to vector<8x32xf32>
    %107 = arith.mulf %66, %106 : vector<8x32xf32>
    %108 = vector.extract_strided_slice %107 {offsets = [0, 0], sizes = [8, 8], strides = [1, 1]} : vector<8x32xf32> to vector<8x8xf32>
    %109 = vector.extract_strided_slice %107 {offsets = [0, 8], sizes = [8, 8], strides = [1, 1]} : vector<8x32xf32> to vector<8x8xf32>
    %110 = vector.extract_strided_slice %107 {offsets = [0, 16], sizes = [8, 8], strides = [1, 1]} : vector<8x32xf32> to vector<8x8xf32>
    %111 = vector.extract_strided_slice %107 {offsets = [0, 24], sizes = [8, 8], strides = [1, 1]} : vector<8x32xf32> to vector<8x8xf32>
    %112 = vector.shape_cast %108 : vector<8x8xf32> to vector<1x8x8xf32>
    %113 = vector.shape_cast %109 : vector<8x8xf32> to vector<1x8x8xf32>
    %114 = vector.shape_cast %110 : vector<8x8xf32> to vector<1x8x8xf32>
    %115 = vector.shape_cast %111 : vector<8x8xf32> to vector<1x8x8xf32>
    %116 = tpu.concatenate %112, %113, %114, %115 in 0 : vector<1x8x8xf32>, vector<1x8x8xf32>, vector<1x8x8xf32>, vector<1x8x8xf32> -> vector<4x8x8xf32>
    %117 = tpu.concatenate %105, %116 in 2 : vector<4x8x8xf32>, vector<4x8x8xf32> -> vector<4x8x16xf32>
    %118 = arith.truncf %117 : vector<4x8x16xf32> to vector<4x8x16xbf16>
    %119 = vector.extract_strided_slice %89 {offsets = [0, 0], sizes = [8, 8], strides = [1, 1]} : vector<8x32xf32> to vector<8x8xf32>
    %120 = vector.extract_strided_slice %89 {offsets = [0, 8], sizes = [8, 8], strides = [1, 1]} : vector<8x32xf32> to vector<8x8xf32>
    %121 = vector.extract_strided_slice %89 {offsets = [0, 16], sizes = [8, 8], strides = [1, 1]} : vector<8x32xf32> to vector<8x8xf32>
    %122 = vector.extract_strided_slice %89 {offsets = [0, 24], sizes = [8, 8], strides = [1, 1]} : vector<8x32xf32> to vector<8x8xf32>
    %123 = vector.shape_cast %119 : vector<8x8xf32> to vector<1x8x8xf32>
    %124 = vector.shape_cast %120 : vector<8x8xf32> to vector<1x8x8xf32>
    %125 = vector.shape_cast %121 : vector<8x8xf32> to vector<1x8x8xf32>
    %126 = vector.shape_cast %122 : vector<8x8xf32> to vector<1x8x8xf32>
    %127 = tpu.concatenate %123, %124, %125, %126 in 0 : vector<1x8x8xf32>, vector<1x8x8xf32>, vector<1x8x8xf32>, vector<1x8x8xf32> -> vector<4x8x8xf32>
    %128 = vector.extract_strided_slice %94 {offsets = [0, 0], sizes = [8, 8], strides = [1, 1]} : vector<8x32xf32> to vector<8x8xf32>
    %129 = vector.extract_strided_slice %94 {offsets = [0, 8], sizes = [8, 8], strides = [1, 1]} : vector<8x32xf32> to vector<8x8xf32>
    %130 = vector.extract_strided_slice %94 {offsets = [0, 16], sizes = [8, 8], strides = [1, 1]} : vector<8x32xf32> to vector<8x8xf32>
    %131 = vector.extract_strided_slice %94 {offsets = [0, 24], sizes = [8, 8], strides = [1, 1]} : vector<8x32xf32> to vector<8x8xf32>
    %132 = vector.shape_cast %128 : vector<8x8xf32> to vector<1x8x8xf32>
    %133 = vector.shape_cast %129 : vector<8x8xf32> to vector<1x8x8xf32>
    %134 = vector.shape_cast %130 : vector<8x8xf32> to vector<1x8x8xf32>
    %135 = vector.shape_cast %131 : vector<8x8xf32> to vector<1x8x8xf32>
    %136 = tpu.concatenate %132, %133, %134, %135 in 0 : vector<1x8x8xf32>, vector<1x8x8xf32>, vector<1x8x8xf32>, vector<1x8x8xf32> -> vector<4x8x8xf32>
    %137 = tpu.concatenate %127, %136 in 2 : vector<4x8x8xf32>, vector<4x8x8xf32> -> vector<4x8x16xf32>
    %138 = arith.truncf %137 : vector<4x8x16xf32> to vector<4x8x16xbf16>
    %139 = vector.extract_strided_slice %43 {offsets = [0, 0], sizes = [8, 8], strides = [1, 1]} : vector<8x32xf32> to vector<8x8xf32>
    %140 = vector.extract_strided_slice %43 {offsets = [0, 8], sizes = [8, 8], strides = [1, 1]} : vector<8x32xf32> to vector<8x8xf32>
    %141 = vector.extract_strided_slice %43 {offsets = [0, 16], sizes = [8, 8], strides = [1, 1]} : vector<8x32xf32> to vector<8x8xf32>
    %142 = vector.extract_strided_slice %43 {offsets = [0, 24], sizes = [8, 8], strides = [1, 1]} : vector<8x32xf32> to vector<8x8xf32>
    %143 = vector.shape_cast %139 : vector<8x8xf32> to vector<1x8x8xf32>
    %144 = vector.shape_cast %140 : vector<8x8xf32> to vector<1x8x8xf32>
    %145 = vector.shape_cast %141 : vector<8x8xf32> to vector<1x8x8xf32>
    %146 = vector.shape_cast %142 : vector<8x8xf32> to vector<1x8x8xf32>
    %147 = tpu.concatenate %143, %144, %145, %146 in 0 : vector<1x8x8xf32>, vector<1x8x8xf32>, vector<1x8x8xf32>, vector<1x8x8xf32> -> vector<4x8x8xf32>
    %148 = arith.truncf %147 : vector<4x8x8xf32> to vector<4x8x8xbf16>
    "tpu.trace_start"() <{level = 10 : i32, message = "nqd,nkd->nqk"}> : () -> ()
    %cst_65 = arith.constant dense<0.000000e+00> : vector<4x8x8xf32>
    %149 = tpu.matmul %118, %138, %cst_65 {dimension_numbers = #tpu.dot_dimension_numbers<[2], [2], [1], [1], [0, 0, 0, 1, 1, 1], [0], [0]>} : vector<4x8x16xbf16>, vector<4x8x16xbf16>, vector<4x8x8xf32> -> vector<4x8x8xf32>
    "tpu.trace_stop"() : () -> ()
    %c8_i32 = arith.constant 8 : i32
    %150 = arith.muli %arg1, %c8_i32 : i32
    %151 = tpu.iota {dimensions = array<i32: 0>} : vector<8x8xi32>
    %152 = vector.broadcast %150 : i32 to vector<8x8xi32>
    %153 = arith.addi %152, %151 : vector<8x8xi32>
    %154 = tpu.iota {dimensions = array<i32: 1>} : vector<8x8xi32>
    %155 = arith.cmpi sle, %154, %153 : vector<8x8xi32>
    %156 = vector.shape_cast %155 : vector<8x8xi1> to vector<1x8x8xi1>
    %cst_66 = arith.constant -1.70141173E+38 : f32
    %157 = vector.shape_cast %156 : vector<1x8x8xi1> to vector<1x8x8xi1>
    %158 = vector.broadcast %157 : vector<1x8x8xi1> to vector<4x8x8xi1>
    %159 = vector.broadcast %cst_66 : f32 to vector<4x8x8xf32>
    %160 = arith.select %158, %149, %159 : vector<4x8x8xi1>, vector<4x8x8xf32>
    %cst_67 = arith.constant dense<0xFF800000> : vector<4x8xf32>
    %161 = vector.multi_reduction <maximumf>, %160, %cst_67 [2] : vector<4x8x8xf32> to vector<4x8xf32>
    %162 = vector.shape_cast %161 : vector<4x8xf32> to vector<4x8x1xf32>
    %163 = vector.broadcast %162 : vector<4x8x1xf32> to vector<4x8x8xf32>
    %164 = arith.subf %160, %163 : vector<4x8x8xf32>
    %165 = math.exp %164 : vector<4x8x8xf32>
    %cst_68 = arith.constant dense<0.000000e+00> : vector<4x8xf32>
    %166 = vector.multi_reduction <add>, %165, %cst_68 [2] : vector<4x8x8xf32> to vector<4x8xf32>
    %167 = vector.shape_cast %166 : vector<4x8xf32> to vector<4x8x1xf32>
    %168 = tpu.reciprocal %167 {approx = true} : vector<4x8x1xf32> -> vector<4x8x1xf32>
    %169 = vector.broadcast %168 : vector<4x8x1xf32> to vector<4x8x8xf32>
    %170 = arith.mulf %165, %169 : vector<4x8x8xf32>
    %171 = arith.truncf %170 : vector<4x8x8xf32> to vector<4x8x8xbf16>
    "tpu.trace_start"() <{level = 10 : i32, message = "nqk,nkd->nqd"}> : () -> ()
    %cst_69 = arith.constant dense<0.000000e+00> : vector<4x8x8xf32>
    %172 = tpu.matmul %171, %148, %cst_69 {dimension_numbers = #tpu.dot_dimension_numbers<[2], [1], [1], [2], [0, 0, 0, 1, 1, 2], [0], [0]>} : vector<4x8x8xbf16>, vector<4x8x8xbf16>, vector<4x8x8xf32> -> vector<4x8x8xf32>
    "tpu.trace_stop"() : () -> ()
    %173 = vector.extract_strided_slice %172 {offsets = [0, 0, 0], sizes = [1, 8, 8], strides = [1, 1, 1]} : vector<4x8x8xf32> to vector<1x8x8xf32>
    %174 = vector.shape_cast %173 : vector<1x8x8xf32> to vector<8x8xf32>
    %175 = vector.extract_strided_slice %172 {offsets = [1, 0, 0], sizes = [1, 8, 8], strides = [1, 1, 1]} : vector<4x8x8xf32> to vector<1x8x8xf32>
    %176 = vector.shape_cast %175 : vector<1x8x8xf32> to vector<8x8xf32>
    %177 = vector.extract_strided_slice %172 {offsets = [2, 0, 0], sizes = [1, 8, 8], strides = [1, 1, 1]} : vector<4x8x8xf32> to vector<1x8x8xf32>
    %178 = vector.shape_cast %177 : vector<1x8x8xf32> to vector<8x8xf32>
    %179 = vector.extract_strided_slice %172 {offsets = [3, 0, 0], sizes = [1, 8, 8], strides = [1, 1, 1]} : vector<4x8x8xf32> to vector<1x8x8xf32>
    %180 = vector.shape_cast %179 : vector<1x8x8xf32> to vector<8x8xf32>
    %181 = tpu.concatenate %174, %176, %178, %180 in 1 : vector<8x8xf32>, vector<8x8xf32>, vector<8x8xf32>, vector<8x8xf32> -> vector<8x32xf32>
    %182 = arith.truncf %181 : vector<8x32xf32> to vector<8x32xbf16>
    %c0_70 = arith.constant 0 : index
    %c0_71 = arith.constant 0 : index
    %183 = vector.load %arg17[%c0_70, %c0_71] : memref<32x32xbf16, #tpu.memory_space<vmem>>, vector<32x32xbf16>
    %cst_72 = arith.constant dense<0.000000e+00> : vector<8x32xf32>
    %184 = tpu.matmul %182, %183, %cst_72 {dimension_numbers = #tpu.dot_dimension_numbers<[1], [0], [0], [1], [0, 0, 1, 1], [], []>} : vector<8x32xbf16>, vector<32x32xbf16>, vector<8x32xf32> -> vector<8x32xf32>
    %185 = arith.addf %1, %184 : vector<8x32xf32>
    %c0_73 = arith.constant 0 : index
    %c0_74 = arith.constant 0 : index
    %186 = vector.load %arg18[%c0_73, %c0_74] : memref<1x32xf32, #tpu.memory_space<vmem>>, vector<1x32xf32>
    %187 = arith.mulf %185, %185 : vector<8x32xf32>
    %cst_75 = arith.constant dense<0.000000e+00> : vector<8xf32>
    %188 = vector.multi_reduction <add>, %187, %cst_75 [1] : vector<8x32xf32> to vector<8xf32>
    %189 = vector.shape_cast %188 : vector<8xf32> to vector<8x1xf32>
    %cst_76 = arith.constant 3.200000e+01 : f32
    %190 = vector.broadcast %cst_76 : f32 to vector<8x1xf32>
    %191 = arith.divf %189, %190 : vector<8x1xf32>
    %cst_77 = arith.constant 9.99999997E-7 : f32
    %192 = vector.broadcast %cst_77 : f32 to vector<8x1xf32>
    %193 = arith.addf %191, %192 : vector<8x1xf32>
    %194 = math.rsqrt %193 : vector<8x1xf32>
    %195 = vector.broadcast %194 : vector<8x1xf32> to vector<8x32xf32>
    %196 = arith.mulf %185, %195 : vector<8x32xf32>
    %197 = vector.broadcast %186 : vector<1x32xf32> to vector<8x32xf32>
    %198 = arith.mulf %196, %197 : vector<8x32xf32>
    %199 = arith.truncf %198 : vector<8x32xf32> to vector<8x32xbf16>
    %c0_78 = arith.constant 0 : index
    %c0_79 = arith.constant 0 : index
    %200 = vector.load %arg19[%c0_78, %c0_79] : memref<32x128xbf16, #tpu.memory_space<vmem>>, vector<32x128xbf16>
    %cst_80 = arith.constant dense<0.000000e+00> : vector<8x128xf32>
    %201 = tpu.matmul %199, %200, %cst_80 {dimension_numbers = #tpu.dot_dimension_numbers<[1], [0], [0], [1], [0, 0, 1, 1], [], []>} : vector<8x32xbf16>, vector<32x128xbf16>, vector<8x128xf32> -> vector<8x128xf32>
    %202 = vector.extract_strided_slice %201 {offsets = [0, 0], sizes = [8, 64], strides = [1, 1]} : vector<8x128xf32> to vector<8x64xf32>
    %203 = vector.extract_strided_slice %201 {offsets = [0, 64], sizes = [8, 64], strides = [1, 1]} : vector<8x128xf32> to vector<8x64xf32>
    %204 = arith.negf %202 : vector<8x64xf32>
    %205 = math.exp %204 : vector<8x64xf32>
    %cst_81 = arith.constant 1.000000e+00 : f32
    %206 = vector.broadcast %cst_81 : f32 to vector<8x64xf32>
    %207 = arith.addf %206, %205 : vector<8x64xf32>
    %208 = arith.divf %206, %207 : vector<8x64xf32>
    %209 = arith.mulf %202, %208 : vector<8x64xf32>
    %210 = arith.mulf %209, %203 : vector<8x64xf32>
    %211 = arith.truncf %210 : vector<8x64xf32> to vector<8x64xbf16>
    %c0_82 = arith.constant 0 : index
    %c0_83 = arith.constant 0 : index
    %212 = vector.load %arg20[%c0_82, %c0_83] : memref<64x32xbf16, #tpu.memory_space<vmem>>, vector<64x32xbf16>
    %cst_84 = arith.constant dense<0.000000e+00> : vector<8x32xf32>
    %213 = tpu.matmul %211, %212, %cst_84 {dimension_numbers = #tpu.dot_dimension_numbers<[1], [0], [0], [1], [0, 0, 1, 1], [], []>} : vector<8x64xbf16>, vector<64x32xbf16>, vector<8x32xf32> -> vector<8x32xf32>
    %214 = arith.addf %185, %213 : vector<8x32xf32>
    %c0_85 = arith.constant 0 : index
    %c0_86 = arith.constant 0 : index
    %c0_87 = arith.constant 0 : index
    %215 = vector.load %arg21[%c0_85, %c0_86, %c0_87] : memref<1x8x32xf32, #tpu.memory_space<vmem>>, vector<1x8x32xf32>
    %216 = vector.shape_cast %215 : vector<1x8x32xf32> to vector<8x32xf32>
    %217 = vector.shape_cast %214 : vector<8x32xf32> to vector<1x8x32xf32>
    tpu.vector_store %arg21[%c0_85, %c0_86, %c0_87], %217 {strides = array<i32>} : memref<1x8x32xf32, #tpu.memory_space<vmem>>, vector<1x8x32xf32>,
    return
  }
  func.func @transform_0(%arg0: i32, %arg1: i32) -> (i32, i32, i32) {
    %c0_i32 = arith.constant 0 : i32
    %c0_i32_0 = arith.constant 0 : i32
    return %arg0, %arg1, %c0_i32 : i32, i32, i32
  }
  func.func @transform_1(%arg0: i32, %arg1: i32) -> (i32, i32, i32) {
    %c0_i32 = arith.constant 0 : i32
    %c0_i32_0 = arith.constant 0 : i32
    %c0_i32_1 = arith.constant 0 : i32
    return %arg0, %c0_i32, %c0_i32_0 : i32, i32, i32
  }
  func.func @transform_2(%arg0: i32, %arg1: i32) -> (i32, i32, i32) {
    %c0_i32 = arith.constant 0 : i32
    %c0_i32_0 = arith.constant 0 : i32
    return %arg0, %arg1, %c0_i32 : i32, i32, i32
  }
  func.func @transform_3(%arg0: i32, %arg1: i32) -> (i32, i32, i32) {
    %c0_i32 = arith.constant 0 : i32
    %c0_i32_0 = arith.constant 0 : i32
    %c0_i32_1 = arith.constant 0 : i32
    return %arg0, %c0_i32, %c0_i32_0 : i32, i32, i32
  }
  func.func @transform_4(%arg0: i32, %arg1: i32) -> (i32, i32) {
    %c0_i32 = arith.constant 0 : i32
    %c0_i32_0 = arith.constant 0 : i32
    return %arg1, %c0_i32 : i32, i32
  }
  func.func @transform_5(%arg0: i32, %arg1: i32) -> (i32, i32) {
    %c0_i32 = arith.constant 0 : i32
    %c0_i32_0 = arith.constant 0 : i32
    return %arg1, %c0_i32 : i32, i32
  }
  func.func @transform_6(%arg0: i32, %arg1: i32) -> (i32, i32) {
    %c0_i32 = arith.constant 0 : i32
    %c0_i32_0 = arith.constant 0 : i32
    return %arg1, %c0_i32 : i32, i32
  }
  func.func @transform_7(%arg0: i32, %arg1: i32) -> (i32, i32) {
    %c0_i32 = arith.constant 0 : i32
    %c0_i32_0 = arith.constant 0 : i32
    %c0_i32_1 = arith.constant 0 : i32
    return %c0_i32, %c0_i32_0 : i32, i32
  }
  func.func @transform_8(%arg0: i32, %arg1: i32) -> (i32, i32) {
    %c0_i32 = arith.constant 0 : i32
    %c0_i32_0 = arith.constant 0 : i32
    %c0_i32_1 = arith.constant 0 : i32
    return %c0_i32, %c0_i32_0 : i32, i32
  }
  func.func @transform_9(%arg0: i32, %arg1: i32) -> (i32, i32) {
    %c0_i32 = arith.constant 0 : i32
    %c0_i32_0 = arith.constant 0 : i32
    %c0_i32_1 = arith.constant 0 : i32
    return %c0_i32, %c0_i32_0 : i32, i32
  }
  func.func @transform_10(%arg0: i32, %arg1: i32) -> (i32, i32) {
    %c0_i32 = arith.constant 0 : i32
    %c0_i32_0 = arith.constant 0 : i32
    %c0_i32_1 = arith.constant 0 : i32
    return %c0_i32, %c0_i32_0 : i32, i32
  }
  func.func @transform_11(%arg0: i32, %arg1: i32) -> (i32, i32) {
    %c0_i32 = arith.constant 0 : i32
    %c0_i32_0 = arith.constant 0 : i32
    %c0_i32_1 = arith.constant 0 : i32
    return %c0_i32, %c0_i32_0 : i32, i32
  }
  func.func @transform_12(%arg0: i32, %arg1: i32) -> (i32, i32) {
    %c0_i32 = arith.constant 0 : i32
    %c0_i32_0 = arith.constant 0 : i32
    %c0_i32_1 = arith.constant 0 : i32
    return %c0_i32, %c0_i32_0 : i32, i32
  }
  func.func @transform_13(%arg0: i32, %arg1: i32) -> (i32, i32) {
    %c0_i32 = arith.constant 0 : i32
    %c0_i32_0 = arith.constant 0 : i32
    %c0_i32_1 = arith.constant 0 : i32
    return %c0_i32, %c0_i32_0 : i32, i32
  }
  func.func @transform_14(%arg0: i32, %arg1: i32) -> (i32, i32) {
    %c0_i32 = arith.constant 0 : i32
    %c0_i32_0 = arith.constant 0 : i32
    %c0_i32_1 = arith.constant 0 : i32
    return %c0_i32, %c0_i32_0 : i32, i32
  }
  func.func @transform_15(%arg0: i32, %arg1: i32) -> (i32, i32) {
    %c0_i32 = arith.constant 0 : i32
    %c0_i32_0 = arith.constant 0 : i32
    %c0_i32_1 = arith.constant 0 : i32
    return %c0_i32, %c0_i32_0 : i32, i32
  }
  func.func @transform_16(%arg0: i32, %arg1: i32) -> (i32, i32) {
    %c0_i32 = arith.constant 0 : i32
    %c0_i32_0 = arith.constant 0 : i32
    %c0_i32_1 = arith.constant 0 : i32
    return %c0_i32, %c0_i32_0 : i32, i32
  }
  func.func @transform_17(%arg0: i32, %arg1: i32) -> (i32, i32) {
    %c0_i32 = arith.constant 0 : i32
    %c0_i32_0 = arith.constant 0 : i32
    %c0_i32_1 = arith.constant 0 : i32
    return %c0_i32, %c0_i32_0 : i32, i32
  }
  func.func @transform_18(%arg0: i32, %arg1: i32) -> (i32, i32) {
    %c0_i32 = arith.constant 0 : i32
    %c0_i32_0 = arith.constant 0 : i32
    %c0_i32_1 = arith.constant 0 : i32
    return %c0_i32, %c0_i32_0 : i32, i32
  }
  func.func @transform_19(%arg0: i32, %arg1: i32) -> (i32, i32, i32) {
    %c0_i32 = arith.constant 0 : i32
    %c0_i32_0 = arith.constant 0 : i32
    return %arg0, %arg1, %c0_i32 : i32, i32, i32
  }
}

</mosaic_0001>

<llo_original>
// kernel: tpu_custom_call.1
$region0: #{tpu_custom_call.1}
  #allocation0 [shape = 'u32[]', space=smem, size = 0x4, offset = 0x4, fixed_abs, tag = 'smem constant byte address 0x4 - core index']
  #allocation1 [shape = 'u32[144,128]{1,0:T(1,128)}', space=vmem, size = 0x12000, scoped, tag = 'internal scratch']
  %s0 = inlined_call_operand.vmem [shape: f32[2,8,32], index: 0, kind: input, shape index: {}]
  %s1 = inlined_call_operand.vmem [shape: f32[2,8,32], index: 1, kind: input, shape index: {}]
  %s2 = inlined_call_operand.vmem [shape: f32[2,8,32], index: 2, kind: input, shape index: {}]
  %s3 = inlined_call_operand.hbm [shape: f32[2,8,32], index: 3, kind: input, shape index: {}]
  %s4 = inlined_call_operand.hbm [shape: f32[8,32], index: 4, kind: input, shape index: {}]
  %s5 = inlined_call_operand.hbm [shape: f32[8,32], index: 5, kind: input, shape index: {}]
  %s6 = inlined_call_operand.hbm [shape: f32[8,32], index: 6, kind: input, shape index: {}]
  %s7 = inlined_call_operand.hbm [shape: f32[8,32], index: 7, kind: input, shape index: {}]
  %s8 = inlined_call_operand.hbm [shape: f32[8,32], index: 8, kind: input, shape index: {}]
  %s9 = inlined_call_operand.hbm [shape: f32[8,32], index: 9, kind: input, shape index: {}]
  %s10 = inlined_call_operand.hbm [shape: f32[1,32], index: 10, kind: input, shape index: {}]
  %s11 = inlined_call_operand.vmem [shape: bf16[32,32], index: 11, kind: input, shape index: {}]
  %s12 = inlined_call_operand.hbm [shape: bf16[32,64], index: 12, kind: input, shape index: {}]
  %s13 = inlined_call_operand.vmem [shape: bf16[32,32], index: 13, kind: input, shape index: {}]
  %s14 = inlined_call_operand.hbm [shape: bf16[32,32], index: 14, kind: input, shape index: {}]
  %s15 = inlined_call_operand.hbm [shape: bf16[32,32], index: 15, kind: input, shape index: {}]
  %s16 = inlined_call_operand.hbm [shape: f32[1,32], index: 16, kind: input, shape index: {}]
  %s17 = inlined_call_operand.vmem [shape: bf16[32,128], index: 17, kind: input, shape index: {}]
  %s18 = inlined_call_operand.vmem [shape: bf16[64,32], index: 18, kind: input, shape index: {}]
  %s19 = inlined_call_operand.hbm [shape: f32[2,8,32], index: 19, kind: output, shape index: {}]
  %s20 = sld [smem:[#allocation0]]
  $region157: #{tpu_custom_call.1} parent=0
    _
  %s22 = ssub.s32 1, %s20
  %s23 = scalar_select 0, %s22, %s20
  $region1: #{tpu_custom_call.1} parent=0
    #allocation2 [shape = 'u8[8192]{0}', space=vmem, size = 0x2000, scoped, tag = 'input window, operand 3']
    #allocation3 [shape = 's32[2]{0}', space=sflag, size = 0x8, scoped, tag = 'scoped memory for tpu_custom_call.1']
    #allocation4 [shape = 's32[2]{0}', space=sflag, size = 0x8, scoped, tag = 'scoped memory for tpu_custom_call.1']
    #allocation5 [shape = 'u8[4096]{0}', space=vmem, size = 0x1000, scoped, tag = 'input window, operand 4, single buffered']
    #allocation6 [shape = 's32[1]{0}', space=sflag, size = 0x4, scoped, tag = 'scoped memory for tpu_custom_call.1']
    #allocation7 [shape = 'u8[4096]{0}', space=vmem, size = 0x1000, scoped, tag = 'input window, operand 5, single buffered']
    #allocation8 [shape = 'u8[4096]{0}', space=vmem, size = 0x1000, scoped, tag = 'input window, operand 6, single buffered']
    #allocation9 [shape = 's32[1]{0}', space=sflag, size = 0x4, scoped, tag = 'scoped memory for tpu_custom_call.1']
    #allocation10 [shape = 'u8[4096]{0}', space=vmem, size = 0x1000, scoped, tag = 'input window, operand 7, single buffered']
    #allocation11 [shape = 'u8[4096]{0}', space=vmem, size = 0x1000, scoped, tag = 'input window, operand 8, single buffered']
    #allocation12 [shape = 's32[1]{0}', space=sflag, size = 0x4, scoped, tag = 'scoped memory for tpu_custom_call.1']
    #allocation13 [shape = 'u8[4096]{0}', space=vmem, size = 0x1000, scoped, tag = 'input window, operand 9, single buffered']
    #allocation14 [shape = 'u8[512]{0}', space=vmem, size = 0x400, scoped, tag = 'input window, operand 10, single buffered']
    #allocation15 [shape = 's32[1]{0}', space=sflag, size = 0x4, scoped, tag = 'scoped memory for tpu_custom_call.1']
    #allocation16 [shape = 'u8[8192]{0}', space=vmem, size = 0x2000, scoped, tag = 'input window, operand 12, single buffered']
    #allocation17 [shape = 'u8[8192]{0}', space=vmem, size = 0x2000, scoped, tag = 'input window, operand 14, single buffered']
    #allocation18 [shape = 's32[1]{0}', space=sflag, size = 0x4, scoped, tag = 'scoped memory for tpu_custom_call.1']
    #allocation19 [shape = 'u8[8192]{0}', space=vmem, size = 0x2000, scoped, tag = 'input window, operand 15, single buffered']
    #allocation20 [shape = 'u8[512]{0}', space=vmem, size = 0x400, scoped, tag = 'input window, operand 16, single buffered']
    #allocation21 [shape = 's32[1]{0}', space=sflag, size = 0x4, scoped, tag = 'scoped memory for tpu_custom_call.1']
    #allocation22 [shape = 'u8[8192]{0}', space=vmem, size = 0x2000, scoped, tag = 'output window, operand 0']
    %24 = vsyncpa [#allocation3], 0
    %s25 = scalar_lea.sflag [#allocation3], 1
    %26 = vsyncpa %s25, 0
    %27 = vsyncpa [#allocation6], 0
    %28 = vsyncpa [#allocation9], 0
    %29 = vsyncpa [#allocation12], 0
    %30 = vsyncpa [#allocation15], 0
    %31 = vsyncpa [#allocation18], 0
    %32 = vsyncpa [#allocation21], 0
    %33 = vsyncpa [#allocation4], 0
    %s34 = scalar_lea.sflag [#allocation4], 1
    %35 = vsyncpa %s34, 0
    loop: start=0, step=1, limit=4
    $region2: #{tpu_custom_call.1} parent=1 // loop_pre_header
      _
    $region3: #{tpu_custom_call.1} parent=1 // loop_header
      %s37 = sphi 0, %s41
      %p38 = scmp.ge.s32.totalorder %s37, 4
      %s44 = sphi 0, %s56
      %s45 = sphi 0, %s52
      %s46 = sphi 0, %s44
      %s47 = sphi 0, %s45
      %s48 = sphi 0, %s46
      %s49 = sphi 0, %s47
      %s61 = sphi 0, %s63
      %s64 = sphi 0, %s61
      %s65 = sphi 0, %s64
      %s81 = sphi 0, %s65
      %s87 = sphi 0, %s89
      %s90 = sphi 0, %s87
      %s91 = sphi 0, %s90
      %s107 = sphi 0, %s91
      %s115 = sphi 0, %s117
      %s118 = sphi 0, %s115
      %s119 = sphi 0, %s118
      %s135 = sphi 0, %s119
      %s141 = sphi 0, %s143
      %s144 = sphi 0, %s141
      %s145 = sphi 0, %s144
      %s161 = sphi 0, %s145
      %s167 = sphi 0, %s169
      %s170 = sphi 0, %s167
      %s171 = sphi 0, %s170
      %s187 = sphi 0, %s171
      %s193 = sphi 0, %s195
      %s196 = sphi 0, %s193
      %s197 = sphi 0, %s196
      %s213 = sphi 0, %s197
      %s219 = sphi 0, %s221
      %s222 = sphi 0, %s219
      %s223 = sphi 0, %s222
      %s239 = sphi 0, %s223
      %s243 = sphi 0, %s243
      %s245 = sphi 0, %s243
      %s246 = sphi 0, %s245
      %s260 = sphi 0, %s246
      %s264 = sphi 0, %s264
      %s266 = sphi 0, %s264
      %s267 = sphi 0, %s266
      %s281 = sphi 0, %s267
      %s285 = sphi 0, %s285
      %s287 = sphi 0, %s285
      %s288 = sphi 0, %s287
      %s302 = sphi 0, %s288
      %s306 = sphi 0, %s306
      %s308 = sphi 0, %s306
      %s309 = sphi 0, %s308
      %s323 = sphi 0, %s309
      %s327 = sphi 0, %s327
      %s329 = sphi 0, %s327
      %s330 = sphi 0, %s329
      %s344 = sphi 0, %s330
      %s348 = sphi 0, %s348
      %s350 = sphi 0, %s348
      %s351 = sphi 0, %s350
      %s365 = sphi 0, %s351
      %s369 = sphi 0, %s369
      %s371 = sphi 0, %s369
      %s372 = sphi 0, %s371
      %s386 = sphi 0, %s372
      %s390 = sphi 0, %s390
      %s392 = sphi 0, %s390
      %s393 = sphi 0, %s392
      %s407 = sphi 0, %s393
      %s411 = sphi 0, %s411
      %s413 = sphi 0, %s411
      %s414 = sphi 0, %s413
      %s428 = sphi 0, %s414
      %s432 = sphi 0, %s432
      %s434 = sphi 0, %s432
      %s435 = sphi 0, %s434
      %s449 = sphi 0, %s435
      %s453 = sphi 0, %s453
      %s455 = sphi 0, %s453
      %s456 = sphi 0, %s455
      %s470 = sphi 0, %s456
      %s474 = sphi 0, %s474
      %s476 = sphi 0, %s474
      %s477 = sphi 0, %s476
      %s491 = sphi 0, %s477
      %s499 = sphi 0, %s501
      %s502 = sphi 0, %s499
      %s503 = sphi 0, %s502
      %s519 = sphi 0, %s503
    $region4: #{tpu_custom_call.1} parent=1 // loop_header_branch
      %40 = sbr.rel (%p38) target = $region8
    $region5: #{tpu_custom_call.1} parent=1 // loop_body
      %s42 = ssub.s32 %s37, 1
      %s43 = ssub.s32 %s37, 2
      %s50 = sadd.s32 1, %s45
      %p51 = scmp.ge.s32.totalorder %s50, 1
      %s52 = scalar_select %p51, 0, %s50
      %s53 = sadd.s32 1, %s44
      %s54 = scalar_select %p51, %s53, %s44
      %p55 = scmp.ge.s32.totalorder %s54, 2
      %s56 = scalar_select %p55, 0, %s54
      %s57 = ssub.s32 %s44, %s56
      %s58 = ssub.s32 %s45, %s52
      %s59 = sor.u32 %s57, %s58
      %p60 = scmp.eq.s32.totalorder %s59, 0
      %s62 = sadd.s32 %s61, 1
      %s63 = scalar_select %p60, %s61, %s62
      %p66 = pneg %p60
      %p67 = scmp.eq.s32.totalorder %s37, 1
      %p68 = por %p66, %p67
      %p69 = scmp.ne.s32.totalorder %s61, %s64
      %p70 = scmp.eq.s32.totalorder %s37, 0
      %p71 = por %p69, %p70
      %p72 = scmp.ne.s32.totalorder %s61, %s64
      %p73 = scmp.eq.s32.totalorder %s42, 1
      %p74 = por %p72, %p73
      %p75 = scmp.ne.s32.totalorder %s64, %s65
      %p76 = scmp.eq.s32.totalorder %s42, 0
      %p77 = por %p75, %p76
      %p78 = scmp.ne.s32.totalorder %s64, %s65
      %p79 = scmp.eq.s32.totalorder %s43, 1
      %p80 = por %p78, %p79
      %p82 = scmp.ne.s32.totalorder %s65, %s81
      %p83 = scmp.eq.s32.totalorder %s43, 0
      %p84 = por %p82, %p83
      %s85 = ssub.s32 %s44, %s56
      %p86 = scmp.eq.s32.totalorder %s85, 0
      %s88 = sadd.s32 %s87, 1
      %s89 = scalar_select %p86, %s87, %s88
      %p92 = pneg %p86
      %p93 = scmp.eq.s32.totalorder %s37, 1
      %p94 = por %p92, %p93
      %p95 = scmp.ne.s32.totalorder %s87, %s90
      %p96 = scmp.eq.s32.totalorder %s37, 0
      %p97 = por %p95, %p96
      %p98 = scmp.ne.s32.totalorder %s87, %s90
      %p99 = scmp.eq.s32.totalorder %s42, 1
      %p100 = por %p98, %p99
      %p101 = scmp.ne.s32.totalorder %s90, %s91
      %p102 = scmp.eq.s32.totalorder %s42, 0
      %p103 = por %p101, %p102
      %p104 = scmp.ne.s32.totalorder %s90, %s91
      %p105 = scmp.eq.s32.totalorder %s43, 1
      %p106 = por %p104, %p105
      %p108 = scmp.ne.s32.totalorder %s91, %s107
      %p109 = scmp.eq.s32.totalorder %s43, 0
      %p110 = por %p108, %p109
      %s111 = ssub.s32 %s44, %s56
      %s112 = ssub.s32 %s45, %s52
      %s113 = sor.u32 %s111, %s112
      %p114 = scmp.eq.s32.totalorder %s113, 0
      %s116 = sadd.s32 %s115, 1
      %s117 = scalar_select %p114, %s115, %s116
      %p120 = pneg %p114
      %p121 = scmp.eq.s32.totalorder %s37, 1
      %p122 = por %p120, %p121
      %p123 = scmp.ne.s32.totalorder %s115, %s118
      %p124 = scmp.eq.s32.totalorder %s37, 0
      %p125 = por %p123, %p124
      %p126 = scmp.ne.s32.totalorder %s115, %s118
      %p127 = scmp.eq.s32.totalorder %s42, 1
      %p128 = por %p126, %p127
      %p129 = scmp.ne.s32.totalorder %s118, %s119
      %p130 = scmp.eq.s32.totalorder %s42, 0
      %p131 = por %p129, %p130
      %p132 = scmp.ne.s32.totalorder %s118, %s119
      %p133 = scmp.eq.s32.totalorder %s43, 1
      %p134 = por %p132, %p133
      %p136 = scmp.ne.s32.totalorder %s119, %s135
      %p137 = scmp.eq.s32.totalorder %s43, 0
      %p138 = por %p136, %p137
      %s139 = ssub.s32 %s44, %s56
      %p140 = scmp.eq.s32.totalorder %s139, 0
      %s142 = sadd.s32 %s141, 1
      %s143 = scalar_select %p140, %s141, %s142
      %p146 = pneg %p140
      %p147 = scmp.eq.s32.totalorder %s37, 1
      %p148 = por %p146, %p147
      %p149 = scmp.ne.s32.totalorder %s141, %s144
      %p150 = scmp.eq.s32.totalorder %s37, 0
      %p151 = por %p149, %p150
      %p152 = scmp.ne.s32.totalorder %s141, %s144
      %p153 = scmp.eq.s32.totalorder %s42, 1
      %p154 = por %p152, %p153
      %p155 = scmp.ne.s32.totalorder %s144, %s145
      %p156 = scmp.eq.s32.totalorder %s42, 0
      %p157 = por %p155, %p156
      %p158 = scmp.ne.s32.totalorder %s144, %s145
      %p159 = scmp.eq.s32.totalorder %s43, 1
      %p160 = por %p158, %p159
      %p162 = scmp.ne.s32.totalorder %s145, %s161
      %p163 = scmp.eq.s32.totalorder %s43, 0
      %p164 = por %p162, %p163
      %s165 = ssub.s32 %s45, %s52
      %p166 = scmp.eq.s32.totalorder %s165, 0
      %s168 = sadd.s32 %s167, 1
      %s169 = scalar_select %p166, %s167, %s168
      %p172 = pneg %p166
      %p173 = scmp.eq.s32.totalorder %s37, 1
      %p174 = por %p172, %p173
      %p175 = scmp.ne.s32.totalorder %s167, %s170
      %p176 = scmp.eq.s32.totalorder %s37, 0
      %p177 = por %p175, %p176
      %p178 = scmp.ne.s32.totalorder %s167, %s170
      %p179 = scmp.eq.s32.totalorder %s42, 1
      %p180 = por %p178, %p179
      %p181 = scmp.ne.s32.totalorder %s170, %s171
      %p182 = scmp.eq.s32.totalorder %s42, 0
      %p183 = por %p181, %p182
      %p184 = scmp.ne.s32.totalorder %s170, %s171
      %p185 = scmp.eq.s32.totalorder %s43, 1
      %p186 = por %p184, %p185
      %p188 = scmp.ne.s32.totalorder %s171, %s187
      %p189 = scmp.eq.s32.totalorder %s43, 0
      %p190 = por %p188, %p189
      %s191 = ssub.s32 %s45, %s52
      %p192 = scmp.eq.s32.totalorder %s191, 0
      %s194 = sadd.s32 %s193, 1
      %s195 = scalar_select %p192, %s193, %s194
      %p198 = pneg %p192
      %p199 = scmp.eq.s32.totalorder %s37, 1
      %p200 = por %p198, %p199
      %p201 = scmp.ne.s32.totalorder %s193, %s196
      %p202 = scmp.eq.s32.totalorder %s37, 0
      %p203 = por %p201, %p202
      %p204 = scmp.ne.s32.totalorder %s193, %s196
      %p205 = scmp.eq.s32.totalorder %s42, 1
      %p206 = por %p204, %p205
      %p207 = scmp.ne.s32.totalorder %s196, %s197
      %p208 = scmp.eq.s32.totalorder %s42, 0
      %p209 = por %p207, %p208
      %p210 = scmp.ne.s32.totalorder %s196, %s197
      %p211 = scmp.eq.s32.totalorder %s43, 1
      %p212 = por %p210, %p211
      %p214 = scmp.ne.s32.totalorder %s197, %s213
      %p215 = scmp.eq.s32.totalorder %s43, 0
      %p216 = por %p214, %p215
      %s217 = ssub.s32 %s45, %s52
      %p218 = scmp.eq.s32.totalorder %s217, 0
      %s220 = sadd.s32 %s219, 1
      %s221 = scalar_select %p218, %s219, %s220
      %p224 = pneg %p218
      %p225 = scmp.eq.s32.totalorder %s37, 1
      %p226 = por %p224, %p225
      %p227 = scmp.ne.s32.totalorder %s219, %s222
      %p228 = scmp.eq.s32.totalorder %s37, 0
      %p229 = por %p227, %p228
      %p230 = scmp.ne.s32.totalorder %s219, %s222
      %p231 = scmp.eq.s32.totalorder %s42, 1
      %p232 = por %p230, %p231
      %p233 = scmp.ne.s32.totalorder %s222, %s223
      %p234 = scmp.eq.s32.totalorder %s42, 0
      %p235 = por %p233, %p234
      %p236 = scmp.ne.s32.totalorder %s222, %s223
      %p237 = scmp.eq.s32.totalorder %s43, 1
      %p238 = por %p236, %p237
      %p240 = scmp.ne.s32.totalorder %s223, %s239
      %p241 = scmp.eq.s32.totalorder %s43, 0
      %p242 = por %p240, %p241
      %s244 = sadd.s32 %s243, 1
      %p247 = scmp.eq.s32.totalorder %s37, 1
      %p248 = scmp.ne.s32.totalorder %s243, %s245
      %p249 = scmp.eq.s32.totalorder %s37, 0
      %p250 = por %p248, %p249
      %p251 = scmp.ne.s32.totalorder %s243, %s245
      %p252 = scmp.eq.s32.totalorder %s42, 1
      %p253 = por %p251, %p252
      %p254 = scmp.ne.s32.totalorder %s245, %s246
      %p255 = scmp.eq.s32.totalorder %s42, 0
      %p256 = por %p254, %p255
      %p257 = scmp.ne.s32.totalorder %s245, %s246
      %p258 = scmp.eq.s32.totalorder %s43, 1
      %p259 = por %p257, %p258
      %p261 = scmp.ne.s32.totalorder %s246, %s260
      %p262 = scmp.eq.s32.totalorder %s43, 0
      %p263 = por %p261, %p262
      %s265 = sadd.s32 %s264, 1
      %p268 = scmp.eq.s32.totalorder %s37, 1
      %p269 = scmp.ne.s32.totalorder %s264, %s266
      %p270 = scmp.eq.s32.totalorder %s37, 0
      %p271 = por %p269, %p270
      %p272 = scmp.ne.s32.totalorder %s264, %s266
      %p273 = scmp.eq.s32.totalorder %s42, 1
      %p274 = por %p272, %p273
      %p275 = scmp.ne.s32.totalorder %s266, %s267
      %p276 = scmp.eq.s32.totalorder %s42, 0
      %p277 = por %p275, %p276
      %p278 = scmp.ne.s32.totalorder %s266, %s267
      %p279 = scmp.eq.s32.totalorder %s43, 1
      %p280 = por %p278, %p279
      %p282 = scmp.ne.s32.totalorder %s267, %s281
      %p283 = scmp.eq.s32.totalorder %s43, 0
      %p284 = por %p282, %p283
      %s286 = sadd.s32 %s285, 1
      %p289 = scmp.eq.s32.totalorder %s37, 1
      %p290 = scmp.ne.s32.totalorder %s285, %s287
      %p291 = scmp.eq.s32.totalorder %s37, 0
      %p292 = por %p290, %p291
      %p293 = scmp.ne.s32.totalorder %s285, %s287
      %p294 = scmp.eq.s32.totalorder %s42, 1
      %p295 = por %p293, %p294
      %p296 = scmp.ne.s32.totalorder %s287, %s288
      %p297 = scmp.eq.s32.totalorder %s42, 0
      %p298 = por %p296, %p297
      %p299 = scmp.ne.s32.totalorder %s287, %s288
      %p300 = scmp.eq.s32.totalorder %s43, 1
      %p301 = por %p299, %p300
      %p303 = scmp.ne.s32.totalorder %s288, %s302
      %p304 = scmp.eq.s32.totalorder %s43, 0
      %p305 = por %p303, %p304
      %s307 = sadd.s32 %s306, 1
      %p310 = scmp.eq.s32.totalorder %s37, 1
      %p311 = scmp.ne.s32.totalorder %s306, %s308
      %p312 = scmp.eq.s32.totalorder %s37, 0
      %p313 = por %p311, %p312
      %p314 = scmp.ne.s32.totalorder %s306, %s308
      %p315 = scmp.eq.s32.totalorder %s42, 1
      %p316 = por %p314, %p315
      %p317 = scmp.ne.s32.totalorder %s308, %s309
      %p318 = scmp.eq.s32.totalorder %s42, 0
      %p319 = por %p317, %p318
      %p320 = scmp.ne.s32.totalorder %s308, %s309
      %p321 = scmp.eq.s32.totalorder %s43, 1
      %p322 = por %p320, %p321
      %p324 = scmp.ne.s32.totalorder %s309, %s323
      %p325 = scmp.eq.s32.totalorder %s43, 0
      %p326 = por %p324, %p325
      %s328 = sadd.s32 %s327, 1
      %p331 = scmp.eq.s32.totalorder %s37, 1
      %p332 = scmp.ne.s32.totalorder %s327, %s329
      %p333 = scmp.eq.s32.totalorder %s37, 0
      %p334 = por %p332, %p333
      %p335 = scmp.ne.s32.totalorder %s327, %s329
      %p336 = scmp.eq.s32.totalorder %s42, 1
      %p337 = por %p335, %p336
      %p338 = scmp.ne.s32.totalorder %s329, %s330
      %p339 = scmp.eq.s32.totalorder %s42, 0
      %p340 = por %p338, %p339
      %p341 = scmp.ne.s32.totalorder %s329, %s330
      %p342 = scmp.eq.s32.totalorder %s43, 1
      %p343 = por %p341, %p342
      %p345 = scmp.ne.s32.totalorder %s330, %s344
      %p346 = scmp.eq.s32.totalorder %s43, 0
      %p347 = por %p345, %p346
      %s349 = sadd.s32 %s348, 1
      %p352 = scmp.eq.s32.totalorder %s37, 1
      %p353 = scmp.ne.s32.totalorder %s348, %s350
      %p354 = scmp.eq.s32.totalorder %s37, 0
      %p355 = por %p353, %p354
      %p356 = scmp.ne.s32.totalorder %s348, %s350
      %p357 = scmp.eq.s32.totalorder %s42, 1
      %p358 = por %p356, %p357
      %p359 = scmp.ne.s32.totalorder %s350, %s351
      %p360 = scmp.eq.s32.totalorder %s42, 0
      %p361 = por %p359, %p360
      %p362 = scmp.ne.s32.totalorder %s350, %s351
      %p363 = scmp.eq.s32.totalorder %s43, 1
      %p364 = por %p362, %p363
      %p366 = scmp.ne.s32.totalorder %s351, %s365
      %p367 = scmp.eq.s32.totalorder %s43, 0
      %p368 = por %p366, %p367
      %s370 = sadd.s32 %s369, 1
      %p373 = scmp.eq.s32.totalorder %s37, 1
      %p374 = scmp.ne.s32.totalorder %s369, %s371
      %p375 = scmp.eq.s32.totalorder %s37, 0
      %p376 = por %p374, %p375
      %p377 = scmp.ne.s32.totalorder %s369, %s371
      %p378 = scmp.eq.s32.totalorder %s42, 1
      %p379 = por %p377, %p378
      %p380 = scmp.ne.s32.totalorder %s371, %s372
      %p381 = scmp.eq.s32.totalorder %s42, 0
      %p382 = por %p380, %p381
      %p383 = scmp.ne.s32.totalorder %s371, %s372
      %p384 = scmp.eq.s32.totalorder %s43, 1
      %p385 = por %p383, %p384
      %p387 = scmp.ne.s32.totalorder %s372, %s386
      %p388 = scmp.eq.s32.totalorder %s43, 0
      %p389 = por %p387, %p388
      %s391 = sadd.s32 %s390, 1
      %p394 = scmp.eq.s32.totalorder %s37, 1
      %p395 = scmp.ne.s32.totalorder %s390, %s392
      %p396 = scmp.eq.s32.totalorder %s37, 0
      %p397 = por %p395, %p396
      %p398 = scmp.ne.s32.totalorder %s390, %s392
      %p399 = scmp.eq.s32.totalorder %s42, 1
      %p400 = por %p398, %p399
      %p401 = scmp.ne.s32.totalorder %s392, %s393
      %p402 = scmp.eq.s32.totalorder %s42, 0
      %p403 = por %p401, %p402
      %p404 = scmp.ne.s32.totalorder %s392, %s393
      %p405 = scmp.eq.s32.totalorder %s43, 1
      %p406 = por %p404, %p405
      %p408 = scmp.ne.s32.totalorder %s393, %s407
      %p409 = scmp.eq.s32.totalorder %s43, 0
      %p410 = por %p408, %p409
      %s412 = sadd.s32 %s411, 1
      %p415 = scmp.eq.s32.totalorder %s37, 1
      %p416 = scmp.ne.s32.totalorder %s411, %s413
      %p417 = scmp.eq.s32.totalorder %s37, 0
      %p418 = por %p416, %p417
      %p419 = scmp.ne.s32.totalorder %s411, %s413
      %p420 = scmp.eq.s32.totalorder %s42, 1
      %p421 = por %p419, %p420
      %p422 = scmp.ne.s32.totalorder %s413, %s414
      %p423 = scmp.eq.s32.totalorder %s42, 0
      %p424 = por %p422, %p423
      %p425 = scmp.ne.s32.totalorder %s413, %s414
      %p426 = scmp.eq.s32.totalorder %s43, 1
      %p427 = por %p425, %p426
      %p429 = scmp.ne.s32.totalorder %s414, %s428
      %p430 = scmp.eq.s32.totalorder %s43, 0
      %p431 = por %p429, %p430
      %s433 = sadd.s32 %s432, 1
      %p436 = scmp.eq.s32.totalorder %s37, 1
      %p437 = scmp.ne.s32.totalorder %s432, %s434
      %p438 = scmp.eq.s32.totalorder %s37, 0
      %p439 = por %p437, %p438
      %p440 = scmp.ne.s32.totalorder %s432, %s434
      %p441 = scmp.eq.s32.totalorder %s42, 1
      %p442 = por %p440, %p441
      %p443 = scmp.ne.s32.totalorder %s434, %s435
      %p444 = scmp.eq.s32.totalorder %s42, 0
      %p445 = por %p443, %p444
      %p446 = scmp.ne.s32.totalorder %s434, %s435
      %p447 = scmp.eq.s32.totalorder %s43, 1
      %p448 = por %p446, %p447
      %p450 = scmp.ne.s32.totalorder %s435, %s449
      %p451 = scmp.eq.s32.totalorder %s43, 0
      %p452 = por %p450, %p451
      %s454 = sadd.s32 %s453, 1
      %p457 = scmp.eq.s32.totalorder %s37, 1
      %p458 = scmp.ne.s32.totalorder %s453, %s455
      %p459 = scmp.eq.s32.totalorder %s37, 0
      %p460 = por %p458, %p459
      %p461 = scmp.ne.s32.totalorder %s453, %s455
      %p462 = scmp.eq.s32.totalorder %s42, 1
      %p463 = por %p461, %p462
      %p464 = scmp.ne.s32.totalorder %s455, %s456
      %p465 = scmp.eq.s32.totalorder %s42, 0
      %p466 = por %p464, %p465
      %p467 = scmp.ne.s32.totalorder %s455, %s456
      %p468 = scmp.eq.s32.totalorder %s43, 1
      %p469 = por %p467, %p468
      %p471 = scmp.ne.s32.totalorder %s456, %s470
      %p472 = scmp.eq.s32.totalorder %s43, 0
      %p473 = por %p471, %p472
      %s475 = sadd.s32 %s474, 1
      %p478 = scmp.eq.s32.totalorder %s37, 1
      %p479 = scmp.ne.s32.totalorder %s474, %s476
      %p480 = scmp.eq.s32.totalorder %s37, 0
      %p481 = por %p479, %p480
      %p482 = scmp.ne.s32.totalorder %s474, %s476
      %p483 = scmp.eq.s32.totalorder %s42, 1
      %p484 = por %p482, %p483
      %p485 = scmp.ne.s32.totalorder %s476, %s477
      %p486 = scmp.eq.s32.totalorder %s42, 0
      %p487 = por %p485, %p486
      %p488 = scmp.ne.s32.totalorder %s476, %s477
      %p489 = scmp.eq.s32.totalorder %s43, 1
      %p490 = por %p488, %p489
      %p492 = scmp.ne.s32.totalorder %s477, %s491
      %p493 = scmp.eq.s32.totalorder %s43, 0
      %p494 = por %p492, %p493
      %s495 = ssub.s32 %s44, %s56
      %s496 = ssub.s32 %s45, %s52
      %s497 = sor.u32 %s495, %s496
      %p498 = scmp.eq.s32.totalorder %s497, 0
      %s500 = sadd.s32 %s499, 1
      %s501 = scalar_select %p498, %s499, %s500
      %p504 = pneg %p498
      %p505 = scmp.eq.s32.totalorder %s37, 1
      %p506 = por %p504, %p505
      %p507 = scmp.ne.s32.totalorder %s499, %s502
      %p508 = scmp.eq.s32.totalorder %s37, 0
      %p509 = por %p507, %p508
      %p510 = scmp.ne.s32.totalorder %s499, %s502
      %p511 = scmp.eq.s32.totalorder %s42, 1
      %p512 = por %p510, %p511
      %p513 = scmp.ne.s32.totalorder %s502, %s503
      %p514 = scmp.eq.s32.totalorder %s42, 0
      %p515 = por %p513, %p514
      %p516 = scmp.ne.s32.totalorder %s502, %s503
      %p517 = scmp.eq.s32.totalorder %s43, 1
      %p518 = por %p516, %p517
      %p520 = scmp.ne.s32.totalorder %s503, %s519
      %p521 = scmp.eq.s32.totalorder %s43, 0
      %p522 = por %p520, %p521
      %p523 = scmp.le.s32.totalorder 1, %s37
      %p524 = scmp.lt.s32.totalorder %s37, 3
      %p525 = pnand %p523, %p524
      %p526 = pneg %p525
      // Predicated region
      $region9: #{tpu_custom_call.1} parent=5 // pred_check
        _
      $region10: #{tpu_custom_call.1} parent=5 // pred_check_branch
        %528 = sbr.rel (%p525) target = $region12
      $region11: #{tpu_custom_call.1} parent=5 // pred_region
        %s529 = ssub.s32 %s37, 1
        // Predicated region
        $region13: #{tpu_custom_call.1} parent=11 // pred_check
          %p530 = pneg %p183
        $region14: #{tpu_custom_call.1} parent=11 // pred_check_branch
          %532 = sbr.rel (%p530) target = $region16
        $region15: #{tpu_custom_call.1} parent=11 // pred_region
          %s534 = ssub.s32 128, 128
          %535 = vsyncadd [#allocation6], %s534
          %s536 = smul.addr %s47, 128
          %s537 = scalar_lea.hbm %s4, %s536
          %s539 = sshll.u32 [#allocation5], 4
          %s540 = int_to_ptr.vmem [resolvable:$true] %s539
          %542 = dma.hbm_to_vmem [thread:$0]  %s537, 128, %s540, [#allocation6]
        $region16: #{tpu_custom_call.1} parent=11 // pred_fallthru
          _
        // Predicated region
        $region17: #{tpu_custom_call.1} parent=11 // pred_check
          %p543 = pneg %p209
        $region18: #{tpu_custom_call.1} parent=11 // pred_check_branch
          %545 = sbr.rel (%p543) target = $region20
        $region19: #{tpu_custom_call.1} parent=11 // pred_region
          %s547 = ssub.s32 128, 128
          %548 = vsyncadd [#allocation6], %s547
          %s549 = smul.addr %s47, 128
          %s550 = scalar_lea.hbm %s5, %s549
          %s552 = sshll.u32 [#allocation7], 4
          %s553 = int_to_ptr.vmem [resolvable:$true] %s552
          %555 = dma.hbm_to_vmem [thread:$0]  %s550, 128, %s553, [#allocation6]
        $region20: #{tpu_custom_call.1} parent=11 // pred_fallthru
          _
        // Predicated region
        $region21: #{tpu_custom_call.1} parent=11 // pred_check
          %p556 = pneg %p235
        $region22: #{tpu_custom_call.1} parent=11 // pred_check_branch
          %558 = sbr.rel (%p556) target = $region24
        $region23: #{tpu_custom_call.1} parent=11 // pred_region
          %s560 = ssub.s32 128, 128
          %561 = vsyncadd [#allocation9], %s560
          %s562 = smul.addr %s47, 128
          %s563 = scalar_lea.hbm %s6, %s562
          %s565 = sshll.u32 [#allocation8], 4
          %s566 = int_to_ptr.vmem [resolvable:$true] %s565
          %568 = dma.hbm_to_vmem [thread:$0]  %s563, 128, %s566, [#allocation9]
        $region24: #{tpu_custom_call.1} parent=11 // pred_fallthru
          _
        // Predicated region
        $region25: #{tpu_custom_call.1} parent=11 // pred_check
          %p569 = pneg %p256
        $region26: #{tpu_custom_call.1} parent=11 // pred_check_branch
          %571 = sbr.rel (%p569) target = $region28
        $region27: #{tpu_custom_call.1} parent=11 // pred_region
          %s573 = ssub.s32 128, 128
          %574 = vsyncadd [#allocation9], %s573
          %s576 = sshll.u32 [#allocation10], 4
          %s577 = int_to_ptr.vmem [resolvable:$true] %s576
          %579 = dma.hbm_to_vmem [thread:$0]  %s7, 128, %s577, [#allocation9]
        $region28: #{tpu_custom_call.1} parent=11 // pred_fallthru
          _
        // Predicated region
        $region29: #{tpu_custom_call.1} parent=11 // pred_check
          %p580 = pneg %p277
        $region30: #{tpu_custom_call.1} parent=11 // pred_check_branch
          %582 = sbr.rel (%p580) target = $region32
        $region31: #{tpu_custom_call.1} parent=11 // pred_region
          %s584 = ssub.s32 128, 128
          %585 = vsyncadd [#allocation12], %s584
          %s587 = sshll.u32 [#allocation11], 4
          %s588 = int_to_ptr.vmem [resolvable:$true] %s587
          %590 = dma.hbm_to_vmem [thread:$0]  %s8, 128, %s588, [#allocation12]
        $region32: #{tpu_custom_call.1} parent=11 // pred_fallthru
          _
        // Predicated region
        $region33: #{tpu_custom_call.1} parent=11 // pred_check
          %p591 = pneg %p298
        $region34: #{tpu_custom_call.1} parent=11 // pred_check_branch
          %593 = sbr.rel (%p591) target = $region36
        $region35: #{tpu_custom_call.1} parent=11 // pred_region
          %s595 = ssub.s32 128, 128
          %596 = vsyncadd [#allocation12], %s595
          %s598 = sshll.u32 [#allocation13], 4
          %s599 = int_to_ptr.vmem [resolvable:$true] %s598
          %601 = dma.hbm_to_vmem [thread:$0]  %s9, 128, %s599, [#allocation12]
        $region36: #{tpu_custom_call.1} parent=11 // pred_fallthru
          _
        // Predicated region
        $region37: #{tpu_custom_call.1} parent=11 // pred_check
          %p602 = pneg %p319
        $region38: #{tpu_custom_call.1} parent=11 // pred_check_branch
          %604 = sbr.rel (%p602) target = $region40
        $region39: #{tpu_custom_call.1} parent=11 // pred_region
          %s606 = ssub.s32 16, 16
          %607 = vsyncadd [#allocation15], %s606
          %s609 = sshll.u32 [#allocation14], 4
          %s610 = int_to_ptr.vmem [resolvable:$true] %s609
          %612 = dma.hbm_to_vmem [thread:$0]  %s10, 16, %s610, [#allocation15]
        $region40: #{tpu_custom_call.1} parent=11 // pred_fallthru
          _
        // Predicated region
        $region41: #{tpu_custom_call.1} parent=11 // pred_check
          %p613 = pneg %p340
        $region42: #{tpu_custom_call.1} parent=11 // pred_check_branch
          %615 = sbr.rel (%p613) target = $region44
        $region43: #{tpu_custom_call.1} parent=11 // pred_region
          _
        $region44: #{tpu_custom_call.1} parent=11 // pred_fallthru
          _
        // Predicated region
        $region45: #{tpu_custom_call.1} parent=11 // pred_check
          %p616 = pneg %p361
        $region46: #{tpu_custom_call.1} parent=11 // pred_check_branch
          %618 = sbr.rel (%p616) target = $region48
        $region47: #{tpu_custom_call.1} parent=11 // pred_region
          %s620 = ssub.s32 256, 256
          %621 = vsyncadd [#allocation15], %s620
          %s622 = sshll.u32 [#allocation16], 4
          %s623 = int_to_ptr.vmem [resolvable:$true] %s622
          %628 = dma.hbm_to_vmem [thread:$0]  %s12, 256, %s623, [#allocation15], 64, 64, 4
        $region48: #{tpu_custom_call.1} parent=11 // pred_fallthru
          _
        // Predicated region
        $region49: #{tpu_custom_call.1} parent=11 // pred_check
          %p629 = pneg %p382
        $region50: #{tpu_custom_call.1} parent=11 // pred_check_branch
          %631 = sbr.rel (%p629) target = $region52
        $region51: #{tpu_custom_call.1} parent=11 // pred_region
          _
        $region52: #{tpu_custom_call.1} parent=11 // pred_fallthru
          _
        // Predicated region
        $region53: #{tpu_custom_call.1} parent=11 // pred_check
          %p632 = pneg %p403
        $region54: #{tpu_custom_call.1} parent=11 // pred_check_branch
          %634 = sbr.rel (%p632) target = $region56
        $region55: #{tpu_custom_call.1} parent=11 // pred_region
          %s636 = ssub.s32 256, 256
          %637 = vsyncadd [#allocation18], %s636
          %s638 = sshll.u32 [#allocation17], 4
          %s639 = int_to_ptr.vmem [resolvable:$true] %s638
          %644 = dma.hbm_to_vmem [thread:$0]  %s14, 256, %s639, [#allocation18], 64, 64, 4
        $region56: #{tpu_custom_call.1} parent=11 // pred_fallthru
          _
        // Predicated region
        $region57: #{tpu_custom_call.1} parent=11 // pred_check
          %p645 = pneg %p424
        $region58: #{tpu_custom_call.1} parent=11 // pred_check_branch
          %647 = sbr.rel (%p645) target = $region60
        $region59: #{tpu_custom_call.1} parent=11 // pred_region
          %s649 = ssub.s32 256, 256
          %650 = vsyncadd [#allocation18], %s649
          %s651 = sshll.u32 [#allocation19], 4
          %s652 = int_to_ptr.vmem [resolvable:$true] %s651
          %657 = dma.hbm_to_vmem [thread:$0]  %s15, 256, %s652, [#allocation18], 64, 64, 4
        $region60: #{tpu_custom_call.1} parent=11 // pred_fallthru
          _
        // Predicated region
        $region61: #{tpu_custom_call.1} parent=11 // pred_check
          %p658 = pneg %p445
        $region62: #{tpu_custom_call.1} parent=11 // pred_check_branch
          %660 = sbr.rel (%p658) target = $region64
        $region63: #{tpu_custom_call.1} parent=11 // pred_region
          %s662 = ssub.s32 16, 16
          %663 = vsyncadd [#allocation21], %s662
          %s665 = sshll.u32 [#allocation20], 4
          %s666 = int_to_ptr.vmem [resolvable:$true] %s665
          %668 = dma.hbm_to_vmem [thread:$0]  %s16, 16, %s666, [#allocation21]
        $region64: #{tpu_custom_call.1} parent=11 // pred_fallthru
          _
        // Predicated region
        $region65: #{tpu_custom_call.1} parent=11 // pred_check
          %p669 = pneg %p466
        $region66: #{tpu_custom_call.1} parent=11 // pred_check_branch
          %671 = sbr.rel (%p669) target = $region68
        $region67: #{tpu_custom_call.1} parent=11 // pred_region
          _
        $region68: #{tpu_custom_call.1} parent=11 // pred_fallthru
          _
        // Predicated region
        $region69: #{tpu_custom_call.1} parent=11 // pred_check
          %p672 = pneg %p487
        $region70: #{tpu_custom_call.1} parent=11 // pred_check_branch
          %674 = sbr.rel (%p672) target = $region72
        $region71: #{tpu_custom_call.1} parent=11 // pred_region
          _
        $region72: #{tpu_custom_call.1} parent=11 // pred_fallthru
          _
      $region12: #{tpu_custom_call.1} parent=5 // pred_fallthru
        _
      %p675 = scmp.lt.s32.totalorder %s37, 2
      // Predicated region
      $region73: #{tpu_custom_call.1} parent=5 // pred_check
        %p676 = pneg %p675
      $region74: #{tpu_custom_call.1} parent=5 // pred_check_branch
        %678 = sbr.rel (%p676) target = $region76
      $region75: #{tpu_custom_call.1} parent=5 // pred_region
        // Predicated region
        $region77: #{tpu_custom_call.1} parent=75 // pred_check
          %p679 = pneg %p71
        $region78: #{tpu_custom_call.1} parent=75 // pred_check_branch
          %681 = sbr.rel (%p679) target = $region80
        $region79: #{tpu_custom_call.1} parent=75 // pred_region
          %p682 = scmp.lt.s32.totalorder %s44, 1
          %s683 = scalar_select %p682, %s44, 1
          %p684 = scmp.lt.s32.totalorder %s45, 0
          %s685 = scalar_select %p684, %s45, 0
          %s686 = sadd.s32 %s685, %s683
          %s687 = smul.addr %s686, 8
          %s688 = scalar_lea.vmem %s0, %s687
        $region80: #{tpu_custom_call.1} parent=75 // pred_fallthru
          _
        // Predicated region
        $region81: #{tpu_custom_call.1} parent=75 // pred_check
          %p689 = pneg %p97
        $region82: #{tpu_custom_call.1} parent=75 // pred_check_branch
          %691 = sbr.rel (%p689) target = $region84
        $region83: #{tpu_custom_call.1} parent=75 // pred_region
          %p692 = scmp.lt.s32.totalorder %s44, 1
          %s693 = scalar_select %p692, %s44, 1
          %s694 = smul.addr %s693, 8
          %s695 = scalar_lea.vmem %s1, %s694
        $region84: #{tpu_custom_call.1} parent=75 // pred_fallthru
          _
        // Predicated region
        $region85: #{tpu_custom_call.1} parent=75 // pred_check
          %p696 = pneg %p125
        $region86: #{tpu_custom_call.1} parent=75 // pred_check_branch
          %698 = sbr.rel (%p696) target = $region88
        $region87: #{tpu_custom_call.1} parent=75 // pred_region
          %p699 = scmp.lt.s32.totalorder %s44, 1
          %s700 = scalar_select %p699, %s44, 1
          %p701 = scmp.lt.s32.totalorder %s45, 0
          %s702 = scalar_select %p701, %s45, 0
          %s703 = sadd.s32 %s702, %s700
          %s704 = smul.addr %s703, 8
          %s705 = scalar_lea.vmem %s2, %s704
        $region88: #{tpu_custom_call.1} parent=75 // pred_fallthru
          _
        // Predicated region
        $region89: #{tpu_custom_call.1} parent=75 // pred_check
          %p706 = pneg %p151
        $region90: #{tpu_custom_call.1} parent=75 // pred_check_branch
          %708 = sbr.rel (%p706) target = $region92
        $region91: #{tpu_custom_call.1} parent=75 // pred_region
          %s709 = sand.u32 %s141, 1
          %s710 = scalar_lea.sflag [#allocation3], %s709
          %s711 = sand.u32 %s141, 1
          %s712 = smul.addr %s711, 8
          %s713 = scalar_lea.vmem [#allocation2], %s712
          %s715 = ssub.s32 128, 128
          %716 = vsyncadd %s710, %s715
          %s717 = smul.addr %s44, 128
          %s718 = scalar_lea.hbm %s3, %s717
          %s720 = sshll.u32 %s713, 4
          %s721 = int_to_ptr.vmem [resolvable:$true] %s720
          %723 = dma.hbm_to_vmem [thread:$0]  %s718, 128, %s721, %s710
        $region92: #{tpu_custom_call.1} parent=75 // pred_fallthru
          _
      $region76: #{tpu_custom_call.1} parent=5 // pred_fallthru
        _
      %p724 = scmp.le.s32.totalorder 1, %s37
      %p725 = scmp.lt.s32.totalorder %s37, 3
      %p726 = pnand %p724, %p725
      %p727 = pneg %p726
      // Predicated region
      $region93: #{tpu_custom_call.1} parent=5 // pred_check
        _
      $region94: #{tpu_custom_call.1} parent=5 // pred_check_branch
        %729 = sbr.rel (%p726) target = $region96
      $region95: #{tpu_custom_call.1} parent=5 // pred_region
        %s730 = ssub.s32 %s37, 1
        %s731 = sand.u32 %s144, 1
        %s732 = scalar_lea.sflag [#allocation3], %s731
        %s733 = sand.u32 %s144, 1
        %s734 = smul.addr %s733, 8
        %s735 = scalar_lea.vmem [#allocation2], %s734
        // Predicated region
        $region97: #{tpu_custom_call.1} parent=95 // pred_check
          %p736 = pneg %p157
        $region98: #{tpu_custom_call.1} parent=95 // pred_check_branch
          %738 = sbr.rel (%p736) target = $region100
        $region99: #{tpu_custom_call.1} parent=95 // pred_region
          %739 = dma.done %s732, 128
        $region100: #{tpu_custom_call.1} parent=95 // pred_fallthru
          _
        // Predicated region
        $region101: #{tpu_custom_call.1} parent=95 // pred_check
          %p740 = pneg %p183
        $region102: #{tpu_custom_call.1} parent=95 // pred_check_branch
          %742 = sbr.rel (%p740) target = $region104
        $region103: #{tpu_custom_call.1} parent=95 // pred_region
          %743 = dma.done [#allocation6], 128
        $region104: #{tpu_custom_call.1} parent=95 // pred_fallthru
          _
        // Predicated region
        $region105: #{tpu_custom_call.1} parent=95 // pred_check
          %p744 = pneg %p209
        $region106: #{tpu_custom_call.1} parent=95 // pred_check_branch
          %746 = sbr.rel (%p744) target = $region108
        $region107: #{tpu_custom_call.1} parent=95 // pred_region
          %747 = dma.done [#allocation6], 128
        $region108: #{tpu_custom_call.1} parent=95 // pred_fallthru
          _
        // Predicated region
        $region109: #{tpu_custom_call.1} parent=95 // pred_check
          %p748 = pneg %p235
        $region110: #{tpu_custom_call.1} parent=95 // pred_check_branch
          %750 = sbr.rel (%p748) target = $region112
        $region111: #{tpu_custom_call.1} parent=95 // pred_region
          %751 = dma.done [#allocation9], 128
        $region112: #{tpu_custom_call.1} parent=95 // pred_fallthru
          _
        // Predicated region
        $region113: #{tpu_custom_call.1} parent=95 // pred_check
          %p752 = pneg %p256
        $region114: #{tpu_custom_call.1} parent=95 // pred_check_branch
          %754 = sbr.rel (%p752) target = $region116
        $region115: #{tpu_custom_call.1} parent=95 // pred_region
          %755 = dma.done [#allocation9], 128
        $region116: #{tpu_custom_call.1} parent=95 // pred_fallthru
          _
        // Predicated region
        $region117: #{tpu_custom_call.1} parent=95 // pred_check
          %p756 = pneg %p277
        $region118: #{tpu_custom_call.1} parent=95 // pred_check_branch
          %758 = sbr.rel (%p756) target = $region120
        $region119: #{tpu_custom_call.1} parent=95 // pred_region
          %759 = dma.done [#allocation12], 128
        $region120: #{tpu_custom_call.1} parent=95 // pred_fallthru
          _
        // Predicated region
        $region121: #{tpu_custom_call.1} parent=95 // pred_check
          %p760 = pneg %p298
        $region122: #{tpu_custom_call.1} parent=95 // pred_check_branch
          %762 = sbr.rel (%p760) target = $region124
        $region123: #{tpu_custom_call.1} parent=95 // pred_region
          %763 = dma.done [#allocation12], 128
        $region124: #{tpu_custom_call.1} parent=95 // pred_fallthru
          _
        // Predicated region
        $region125: #{tpu_custom_call.1} parent=95 // pred_check
          %p764 = pneg %p319
        $region126: #{tpu_custom_call.1} parent=95 // pred_check_branch
          %766 = sbr.rel (%p764) target = $region128
        $region127: #{tpu_custom_call.1} parent=95 // pred_region
          %767 = dma.done [#allocation15], 16
        $region128: #{tpu_custom_call.1} parent=95 // pred_fallthru
          _
        // Predicated region
        $region129: #{tpu_custom_call.1} parent=95 // pred_check
          %p768 = pneg %p361
        $region130: #{tpu_custom_call.1} parent=95 // pred_check_branch
          %770 = sbr.rel (%p768) target = $region132
        $region131: #{tpu_custom_call.1} parent=95 // pred_region
          %771 = dma.done [#allocation15], 256
        $region132: #{tpu_custom_call.1} parent=95 // pred_fallthru
          _
        // Predicated region
        $region133: #{tpu_custom_call.1} parent=95 // pred_check
          %p772 = pneg %p403
        $region134: #{tpu_custom_call.1} parent=95 // pred_check_branch
          %774 = sbr.rel (%p772) target = $region136
        $region135: #{tpu_custom_call.1} parent=95 // pred_region
          %775 = dma.done [#allocation18], 256
        $region136: #{tpu_custom_call.1} parent=95 // pred_fallthru
          _
        // Predicated region
        $region137: #{tpu_custom_call.1} parent=95 // pred_check
          %p776 = pneg %p424
        $region138: #{tpu_custom_call.1} parent=95 // pred_check_branch
          %778 = sbr.rel (%p776) target = $region140
        $region139: #{tpu_custom_call.1} parent=95 // pred_region
          %779 = dma.done [#allocation18], 256
        $region140: #{tpu_custom_call.1} parent=95 // pred_fallthru
          _
        // Predicated region
        $region141: #{tpu_custom_call.1} parent=95 // pred_check
          %p780 = pneg %p445
        $region142: #{tpu_custom_call.1} parent=95 // pred_check_branch
          %782 = sbr.rel (%p780) target = $region144
        $region143: #{tpu_custom_call.1} parent=95 // pred_region
          %783 = dma.done [#allocation21], 16
        $region144: #{tpu_custom_call.1} parent=95 // pred_fallthru
          _
        %p784 = scmp.lt.s32.totalorder %s46, 1
        %s785 = scalar_select %p784, %s46, 1
        %p786 = scmp.lt.s32.totalorder %s47, 0
        %s787 = scalar_select %p786, %s47, 0
        %s788 = sadd.s32 %s787, %s785
        %s789 = smul.addr %s788, 8
        %s790 = scalar_lea.vmem %s0, %s789
        %p791 = pneg %p77
        %p792 = pneg %p74
        %p793 = scmp.lt.s32.totalorder %s46, 1
        %s794 = scalar_select %p793, %s46, 1
        %s795 = smul.addr %s794, 8
        %s796 = scalar_lea.vmem %s1, %s795
        %p797 = pneg %p103
        %p798 = pneg %p100
        %p799 = scmp.lt.s32.totalorder %s46, 1
        %s800 = scalar_select %p799, %s46, 1
        %p801 = scmp.lt.s32.totalorder %s47, 0
        %s802 = scalar_select %p801, %s47, 0
        %s803 = sadd.s32 %s802, %s800
        %s804 = smul.addr %s803, 8
        %s805 = scalar_lea.vmem %s2, %s804
        %p806 = pneg %p131
        %p807 = pneg %p128
        %s808 = sand.u32 %s144, 1
        %s809 = scalar_lea.sflag [#allocation3], %s808
        %s810 = sand.u32 %s144, 1
        %s811 = smul.addr %s810, 8
        %s812 = scalar_lea.vmem [#allocation2], %s811
        %p813 = pneg %p157
        %p814 = pneg %p154
        %p815 = pneg %p183
        %p816 = pneg %p180
        %p817 = pneg %p209
        %p818 = pneg %p206
        %p819 = pneg %p235
        %p820 = pneg %p232
        %p821 = pneg %p256
        %p822 = pneg %p253
        %p823 = pneg %p277
        %p824 = pneg %p274
        %p825 = pneg %p298
        %p826 = pneg %p295
        %p827 = pneg %p319
        %p828 = pneg %p316
        %p829 = pneg %p340
        %p830 = pneg %p337
        %p831 = pneg %p361
        %p832 = pneg %p358
        %p833 = pneg %p382
        %p834 = pneg %p379
        %p835 = pneg %p403
        %p836 = pneg %p400
        %p837 = pneg %p424
        %p838 = pneg %p421
        %p839 = pneg %p445
        %p840 = pneg %p442
        %p841 = pneg %p466
        %p842 = pneg %p463
        %p843 = pneg %p487
        %p844 = pneg %p484
        %p845 = pneg %p515
        %p846 = pneg %p512
        %s847 = sand.u32 %s502, 1
        %s848 = scalar_lea.sflag [#allocation4], %s847
        %s849 = sand.u32 %s502, 1
        %s850 = smul.addr %s849, 8
        %s851 = scalar_lea.vmem [#allocation22], %s850
        %p852 = scmp.lt.s32.totalorder %s46, 1
        %s853 = scalar_select %p852, %s46, 1
        %p854 = scmp.lt.s32.totalorder %s47, 0
        %s855 = scalar_select %p854, %s47, 0
        %s856 = sadd.s32 %s855, %s853
        %s857 = smul.addr %s856, 8
        %s858 = scalar_lea.vmem %s0, %s857
        %p859 = scmp.lt.s32.totalorder %s46, 1
        %s860 = scalar_select %p859, %s46, 1
        %s861 = smul.addr %s860, 8
        %s862 = scalar_lea.vmem %s1, %s861
        %p863 = scmp.lt.s32.totalorder %s46, 1
        %s864 = scalar_select %p863, %s46, 1
        %p865 = scmp.lt.s32.totalorder %s47, 0
        %s866 = scalar_select %p865, %s47, 0
        %s867 = sadd.s32 %s866, %s864
        %s868 = smul.addr %s867, 8
        %s869 = scalar_lea.vmem %s2, %s868
        %v871 = vld [vmem:[%s858] sm:$0xff]
        %v872 = vld [vmem:[%s862] sm:$0xff]
        %v873 = vld [vmem:[%s869] sm:$0xff]
        %v874 = vld [vmem:[%s735] sm:$0xff]
        %v875 = vld [vmem:[#allocation14] sm:$0x1]
        %v876 = vmul.f32 %v871, %v871
        %vm877 = vcmask 261120
        %v878 = vsel %vm877, %v876, 0.0
        %879 = vadd.xlane.f32.xlu0 %v878
        %v880 = vpop.xlane.xlu0 %879
        %v881 = vrcp.pop 32.0
        %v882 = vmul.f32 %v880, %v881
        %v883 = vadd.f32 %v882, 1e-06
        %v884 = vrsqrt.pop %v883
        %v885 = vmul.f32 %v871, %v884
        %v887 = vlaneseq
        %v888 = vshrl.u32 %v887, 7
        %v889 = vsub.s32 0, %v888
        %v890 = vrot.slane %v875, %v889
        %v892 = vmul.f32 %v885, %v890
        %v893 = vpack.c.bf16 %v892, %v892
        %v894 = vmul.f32 %v872, %v872
        %v895 = vsel %vm877, %v894, 0.0
        %896 = vadd.xlane.f32.xlu0 %v895
        %v897 = vpop.xlane.xlu0 %896
        %v898 = vmul.f32 %v897, %v881
        %v899 = vadd.f32 %v898, 1e-06
        %v900 = vrsqrt.pop %v899
        %v901 = vmul.f32 %v872, %v900
        %v902 = vmul.f32 %v901, %v890
        %v903 = vpack.c.bf16 %v902, %v902
        %v904 = vld [vmem:[%s11] sm:$0xf]
        %v905 = vld [vmem:[%s11 + $0x4] sm:$0xf]
        %v906 = vld [vmem:[%s11 + $0x8] sm:$0xf]
        %v907 = vld [vmem:[%s11 + $0xc] sm:$0xf]
        %v912 = vunpack.c.l.b16 %v904
        %v913 = vunpack.c.l.b16 %v905
        %v914 = vunpack.c.l.b16 %v906
        %v915 = vunpack.c.l.b16 %v907
        %v916 = vpack.c.b16 %v913, %v912
        %v917 = vpack.c.b16 %v915, %v914
        %v921 = vsel %vm877, %v893, 0
        %923 = vmatprep.subr.bf16.mxu0 0
        %924 = vmatpush1.bf16.msra.mxu0 %v916
        %925 = vmatprep.subr.bf16.mxu0 0
        %926 = vmatpush1.bf16.msra.mxu0 %v917
        %927 = vmatprep.subr.bf16.mxu0 0
        %928 = vmatpush1.bf16.msra.mxu0 0
        %929 = vmatprep.subr.bf16.mxu0 0
        %930 = vmatpush1.bf16.msra.mxu0 0
        %931 = vmatprep.subr.bf16.mxu0 0
        %932 = vmatpush1.bf16.msra.mxu0 0
        %933 = vmatprep.subr.bf16.mxu0 0
        %934 = vmatpush1.bf16.msra.mxu0 0
        %935 = vmatprep.subr.bf16.mxu0 0
        %936 = vmatpush1.bf16.msra.mxu0 0
        %937 = vmatprep.subr.bf16.mxu0 0
        %938 = vmatpush1.bf16.msra.mxu0 0
        %939 = vmatprep.subr.bf16.mxu0 0
        %940 = vmatpush1.bf16.msra.mxu0 0
        %941 = vmatprep.subr.bf16.mxu0 0
        %942 = vmatpush1.bf16.msra.mxu0 0
        %943 = vmatprep.subr.bf16.mxu0 0
        %944 = vmatpush1.bf16.msra.mxu0 0
        %945 = vmatprep.subr.bf16.mxu0 0
        %946 = vmatpush1.bf16.msra.mxu0 0
        %947 = vmatprep.subr.bf16.mxu0 0
        %948 = vmatpush1.bf16.msra.mxu0 0
        %949 = vmatprep.subr.bf16.mxu0 0
        %950 = vmatpush1.bf16.msra.mxu0 0
        %951 = vmatprep.subr.bf16.mxu0 0
        %952 = vmatpush1.bf16.msra.mxu0 0
        %953 = vmatprep.subr.bf16.mxu0 0
        %954 = vmatpush1.bf16.msra.mxu0 0
        %955 = vmatprep.mubr.bf16.mxu0 0
        %956 = vmatmul.mubr.bf16.gmra.mrb[0].mxu0 %v921
        %v957 = vpop.f32.mrb[0].mxu0
        %v958 = vadd.f32 0.0, %v957
        %v959 = vpop.f32.mrb[0].mxu0
        %v960 = vpop.f32.mrb[0].mxu0
        %v961 = vpop.f32.mrb[0].mxu0
        %962 = vdwg.mxu0
        %v963 = vpack.c.bf16 %v873, %v873
        %v964 = vld [vmem:[%s13] sm:$0xf]
        %v965 = vld [vmem:[%s13 + $0x4] sm:$0xf]
        %v966 = vld [vmem:[%s13 + $0x8] sm:$0xf]
        %v967 = vld [vmem:[%s13 + $0xc] sm:$0xf]
        %v972 = vunpack.c.l.b16 %v964
        %v973 = vunpack.c.l.b16 %v965
        %v974 = vunpack.c.l.b16 %v966
        %v975 = vunpack.c.l.b16 %v967
        %v976 = vpack.c.b16 %v973, %v972
        %v977 = vpack.c.b16 %v975, %v974
        %v981 = vsel %vm877, %v963, 0
        %983 = vmatprep.subr.bf16.mxu0 0
        %984 = vmatpush1.bf16.msra.mxu0 %v976
        %985 = vmatprep.subr.bf16.mxu0 0
        %986 = vmatpush1.bf16.msra.mxu0 %v977
        %987 = vmatprep.subr.bf16.mxu0 0
        %988 = vmatpush1.bf16.msra.mxu0 0
        %989 = vmatprep.subr.bf16.mxu0 0
        %990 = vmatpush1.bf16.msra.mxu0 0
        %991 = vmatprep.subr.bf16.mxu0 0
        %992 = vmatpush1.bf16.msra.mxu0 0
        %993 = vmatprep.subr.bf16.mxu0 0
        %994 = vmatpush1.bf16.msra.mxu0 0
        %995 = vmatprep.subr.bf16.mxu0 0
        %996 = vmatpush1.bf16.msra.mxu0 0
        %997 = vmatprep.subr.bf16.mxu0 0
        %998 = vmatpush1.bf16.msra.mxu0 0
        %999 = vmatprep.subr.bf16.mxu0 0
        %1000 = vmatpush1.bf16.msra.mxu0 0
        %1001 = vmatprep.subr.bf16.mxu0 0
        %1002 = vmatpush1.bf16.msra.mxu0 0
        %1003 = vmatprep.subr.bf16.mxu0 0
        %1004 = vmatpush1.bf16.msra.mxu0 0
        %1005 = vmatprep.subr.bf16.mxu0 0
        %1006 = vmatpush1.bf16.msra.mxu0 0
        %1007 = vmatprep.subr.bf16.mxu0 0
        %1008 = vmatpush1.bf16.msra.mxu0 0
        %1009 = vmatprep.subr.bf16.mxu0 0
        %1010 = vmatpush1.bf16.msra.mxu0 0
        %1011 = vmatprep.subr.bf16.mxu0 0
        %1012 = vmatpush1.bf16.msra.mxu0 0
        %1013 = vmatprep.subr.bf16.mxu0 0
        %1014 = vmatpush1.bf16.msra.mxu0 0
        %1015 = vmatprep.mubr.bf16.mxu0 0
        %1016 = vmatmul.mubr.bf16.gmra.mrb[0].mxu0 %v981
        %v1017 = vpop.f32.mrb[0].mxu0
        %v1018 = vadd.f32 0.0, %v1017
        %v1019 = vpop.f32.mrb[0].mxu0
        %v1020 = vpop.f32.mrb[0].mxu0
        %v1021 = vpop.f32.mrb[0].mxu0
        %1022 = vdwg.mxu0
        %v1023 = vld [vmem:[#allocation16] sm:$0xf]
        %v1024 = vld [vmem:[#allocation16 + $0x4] sm:$0xf]
        %v1025 = vld [vmem:[#allocation16 + $0x8] sm:$0xf]
        %v1026 = vld [vmem:[#allocation16 + $0xc] sm:$0xf]
        %v1031 = vunpack.c.l.b16 %v1023
        %v1032 = vunpack.c.l.b16 %v1024
        %v1033 = vunpack.c.l.b16 %v1025
        %v1034 = vunpack.c.l.b16 %v1026
        %v1035 = vpack.c.b16 %v1032, %v1031
        %v1036 = vpack.c.b16 %v1034, %v1033
        %v1040 = vsel %vm877, %v903, 0
        %1042 = vmatprep.subr.bf16.mxu0 0
        %1043 = vmatpush1.bf16.msra.mxu0 %v1035
        %1044 = vmatprep.subr.bf16.mxu0 0
        %1045 = vmatpush1.bf16.msra.mxu0 %v1036
        %1046 = vmatprep.subr.bf16.mxu0 0
        %1047 = vmatpush1.bf16.msra.mxu0 0
        %1048 = vmatprep.subr.bf16.mxu0 0
        %1049 = vmatpush1.bf16.msra.mxu0 0
        %1050 = vmatprep.subr.bf16.mxu0 0
        %1051 = vmatpush1.bf16.msra.mxu0 0
        %1052 = vmatprep.subr.bf16.mxu0 0
        %1053 = vmatpush1.bf16.msra.mxu0 0
        %1054 = vmatprep.subr.bf16.mxu0 0
        %1055 = vmatpush1.bf16.msra.mxu0 0
        %1056 = vmatprep.subr.bf16.mxu0 0
        %1057 = vmatpush1.bf16.msra.mxu0 0
        %1058 = vmatprep.subr.bf16.mxu0 0
        %1059 = vmatpush1.bf16.msra.mxu0 0
        %1060 = vmatprep.subr.bf16.mxu0 0
        %1061 = vmatpush1.bf16.msra.mxu0 0
        %1062 = vmatprep.subr.bf16.mxu0 0
        %1063 = vmatpush1.bf16.msra.mxu0 0
        %1064 = vmatprep.subr.bf16.mxu0 0
        %1065 = vmatpush1.bf16.msra.mxu0 0
        %1066 = vmatprep.subr.bf16.mxu0 0
        %1067 = vmatpush1.bf16.msra.mxu0 0
        %1068 = vmatprep.subr.bf16.mxu0 0
        %1069 = vmatpush1.bf16.msra.mxu0 0
        %1070 = vmatprep.subr.bf16.mxu0 0
        %1071 = vmatpush1.bf16.msra.mxu0 0
        %1072 = vmatprep.subr.bf16.mxu0 0
        %1073 = vmatpush1.bf16.msra.mxu0 0
        %1074 = vmatprep.mubr.bf16.mxu0 0
        %1075 = vmatmul.mubr.bf16.gmra.mrb[0].mxu0 %v1040
        %v1076 = vpop.f32.mrb[0].mxu0
        %v1077 = vadd.f32 0.0, %v1076
        %v1078 = vpop.f32.mrb[0].mxu0
        %v1079 = vpop.f32.mrb[0].mxu0
        %v1080 = vpop.f32.mrb[0].mxu0
        %1081 = vdwg.mxu0
        %v1082 = vpack.c.bf16 %v874, %v874
        %v1083 = vld [vmem:[#allocation17] sm:$0xf]
        %v1084 = vld [vmem:[#allocation17 + $0x4] sm:$0xf]
        %v1085 = vld [vmem:[#allocation17 + $0x8] sm:$0xf]
        %v1086 = vld [vmem:[#allocation17 + $0xc] sm:$0xf]
        %v1091 = vunpack.c.l.b16 %v1083
        %v1092 = vunpack.c.l.b16 %v1084
        %v1093 = vunpack.c.l.b16 %v1085
        %v1094 = vunpack.c.l.b16 %v1086
        %v1095 = vpack.c.b16 %v1092, %v1091
        %v1096 = vpack.c.b16 %v1094, %v1093
        %v1100 = vsel %vm877, %v1082, 0
        %1102 = vmatprep.subr.bf16.mxu0 0
        %1103 = vmatpush1.bf16.msra.mxu0 %v1095
        %1104 = vmatprep.subr.bf16.mxu0 0
        %1105 = vmatpush1.bf16.msra.mxu0 %v1096
        %1106 = vmatprep.subr.bf16.mxu0 0
        %1107 = vmatpush1.bf16.msra.mxu0 0
        %1108 = vmatprep.subr.bf16.mxu0 0
        %1109 = vmatpush1.bf16.msra.mxu0 0
        %1110 = vmatprep.subr.bf16.mxu0 0
        %1111 = vmatpush1.bf16.msra.mxu0 0
        %1112 = vmatprep.subr.bf16.mxu0 0
        %1113 = vmatpush1.bf16.msra.mxu0 0
        %1114 = vmatprep.subr.bf16.mxu0 0
        %1115 = vmatpush1.bf16.msra.mxu0 0
        %1116 = vmatprep.subr.bf16.mxu0 0
        %1117 = vmatpush1.bf16.msra.mxu0 0
        %1118 = vmatprep.subr.bf16.mxu0 0
        %1119 = vmatpush1.bf16.msra.mxu0 0
        %1120 = vmatprep.subr.bf16.mxu0 0
        %1121 = vmatpush1.bf16.msra.mxu0 0
        %1122 = vmatprep.subr.bf16.mxu0 0
        %1123 = vmatpush1.bf16.msra.mxu0 0
        %1124 = vmatprep.subr.bf16.mxu0 0
        %1125 = vmatpush1.bf16.msra.mxu0 0
        %1126 = vmatprep.subr.bf16.mxu0 0
        %1127 = vmatpush1.bf16.msra.mxu0 0
        %1128 = vmatprep.subr.bf16.mxu0 0
        %1129 = vmatpush1.bf16.msra.mxu0 0
        %1130 = vmatprep.subr.bf16.mxu0 0
        %1131 = vmatpush1.bf16.msra.mxu0 0
        %1132 = vmatprep.subr.bf16.mxu0 0
        %1133 = vmatpush1.bf16.msra.mxu0 0
        %1134 = vmatprep.mubr.bf16.mxu0 0
        %1135 = vmatmul.mubr.bf16.gmra.mrb[0].mxu0 %v1100
        %v1136 = vpop.f32.mrb[0].mxu0
        %v1137 = vadd.f32 0.0, %v1136
        %v1138 = vpop.f32.mrb[0].mxu0
        %v1139 = vpop.f32.mrb[0].mxu0
        %v1140 = vpop.f32.mrb[0].mxu0
        %1141 = vdwg.mxu0
        %v1142 = vld [vmem:[#allocation5] sm:$0xff]
        %v1143 = vld [vmem:[#allocation7] sm:$0xff]
        %v1144 = vld [vmem:[#allocation8] sm:$0xff]
        %vm1145 = vcmask 1047808
        %1146 = vrot.lane.b32.xlu0 %v958, 32
        %v1147 = vpop.permute.xlu0 %1146
        %v1148 = vsel %vm1145, %v1147, %v958
        %1149 = vrot.lane.b32.xlu0 %v1148, 32
        %v1150 = vpop.permute.xlu0 %1149
        %v1151 = vsel %vm1145, %v1150, %v958
        %v1152 = vmul.f32 %v958, %v1142
        %1154 = vrot.lane.b32.xlu0 %v1143, 28
        %v1155 = vpop.permute.xlu0 %1154
        %v1157 = vmul.f32 %v1151, %v1155
        %1159 = vrot.lane.b32.xlu0 %v1157, 100
        %v1160 = vpop.permute.xlu0 %1159
        %v1162 = vadd.f32 %v1152, %v1160
        %1164 = vrot.lane.b32.xlu0 %v1144, 4
        %v1165 = vpop.permute.xlu0 %1164
        %v1167 = vmul.f32 %v1151, %v1165
        %1169 = vrot.lane.b32.xlu0 %v1167, 124
        %v1170 = vpop.permute.xlu0 %1169
        %v1172 = vadd.f32 %v1162, %v1170
        %1173 = vrot.lane.b32.xlu0 %v1018, 32
        %v1174 = vpop.permute.xlu0 %1173
        %v1175 = vsel %vm1145, %v1174, %v1018
        %1176 = vrot.lane.b32.xlu0 %v1175, 32
        %v1177 = vpop.permute.xlu0 %1176
        %v1178 = vsel %vm1145, %v1177, %v1018
        %v1179 = vmul.f32 %v1018, %v1142
        %v1180 = vmul.f32 %v1178, %v1155
        %1182 = vrot.lane.b32.xlu0 %v1180, 100
        %v1183 = vpop.permute.xlu0 %1182
        %v1185 = vadd.f32 %v1179, %v1183
        %v1186 = vmul.f32 %v1178, %v1165
        %1188 = vrot.lane.b32.xlu0 %v1186, 124
        %v1189 = vpop.permute.xlu0 %1188
        %v1191 = vadd.f32 %v1185, %v1189
        %v1192 = vld [vmem:[#allocation10] sm:$0xff]
        %v1193 = vld [vmem:[#allocation11] sm:$0xff]
        %v1194 = vld [vmem:[#allocation13] sm:$0xff]
        %1195 = vrot.lane.b32.xlu0 %v1077, 32
        %v1196 = vpop.permute.xlu0 %1195
        %v1197 = vsel %vm1145, %v1196, %v1077
        %1198 = vrot.lane.b32.xlu0 %v1197, 32
        %v1199 = vpop.permute.xlu0 %1198
        %v1200 = vsel %vm1145, %v1199, %v1077
        %v1201 = vmul.f32 %v1077, %v1192
        %1203 = vrot.lane.b32.xlu0 %v1193, 28
        %v1204 = vpop.permute.xlu0 %1203
        %v1206 = vmul.f32 %v1200, %v1204
        %1208 = vrot.lane.b32.xlu0 %v1206, 100
        %v1209 = vpop.permute.xlu0 %1208
        %v1211 = vadd.f32 %v1201, %v1209
        %1213 = vrot.lane.b32.xlu0 %v1194, 4
        %v1214 = vpop.permute.xlu0 %1213
        %v1216 = vmul.f32 %v1200, %v1214
        %1218 = vrot.lane.b32.xlu0 %v1216, 124
        %v1219 = vpop.permute.xlu0 %1218
        %v1221 = vadd.f32 %v1211, %v1219
        %1222 = vrot.lane.b32.xlu0 %v1137, 32
        %v1223 = vpop.permute.xlu0 %1222
        %v1224 = vsel %vm1145, %v1223, %v1137
        %1225 = vrot.lane.b32.xlu0 %v1224, 32
        %v1226 = vpop.permute.xlu0 %1225
        %v1227 = vsel %vm1145, %v1226, %v1137
        %v1228 = vmul.f32 %v1137, %v1192
        %v1229 = vmul.f32 %v1227, %v1204
        %1231 = vrot.lane.b32.xlu0 %v1229, 100
        %v1232 = vpop.permute.xlu0 %1231
        %v1234 = vadd.f32 %v1228, %v1232
        %v1235 = vmul.f32 %v1227, %v1214
        %1237 = vrot.lane.b32.xlu0 %v1235, 124
        %v1238 = vpop.permute.xlu0 %1237
        %v1240 = vadd.f32 %v1234, %v1238
        %v1241 = vadd.f32 %v1221, %v1240
        %v1242 = vmul.f32 %v1172, 0.35355338
        %1244 = vrot.lane.b32.xlu0 %v1242, 120
        %v1245 = vpop.permute.xlu0 %1244
        %1247 = vrot.lane.b32.xlu0 %v1242, 112
        %v1248 = vpop.permute.xlu0 %1247
        %1250 = vrot.lane.b32.xlu0 %v1242, 104
        %v1251 = vpop.permute.xlu0 %1250
        %v1253 = vmul.f32 %v1191, 0.35355338
        %1255 = vrot.lane.b32.xlu0 %v1253, 120
        %v1256 = vpop.permute.xlu0 %1255
        %1257 = vrot.lane.b32.xlu0 %v1253, 112
        %v1258 = vpop.permute.xlu0 %1257
        %1259 = vrot.lane.b32.xlu0 %v1253, 104
        %v1260 = vpop.permute.xlu0 %1259
        %1261 = vrot.lane.b32.xlu0 %v1253, 8
        %v1262 = vpop.permute.xlu0 %1261
        %1263 = vrot.lane.b32.xlu0 %v1256, 8
        %v1264 = vpop.permute.xlu0 %1263
        %1265 = vrot.lane.b32.xlu0 %v1258, 8
        %v1266 = vpop.permute.xlu0 %1265
        %1267 = vrot.lane.b32.xlu0 %v1260, 8
        %v1268 = vpop.permute.xlu0 %1267
        %vm1273 = vcmask 64512
        %v1274 = vsel %vm1273, %v1242, %v1262
        %v1275 = vsel %vm1273, %v1245, %v1264
        %v1276 = vsel %vm1273, %v1248, %v1266
        %v1277 = vsel %vm1273, %v1251, %v1268
        %v1278 = vpack.c.bf16 %v1274, %v1274
        %v1279 = vpack.c.bf16 %v1275, %v1275
        %v1280 = vpack.c.bf16 %v1276, %v1276
        %v1281 = vpack.c.bf16 %v1277, %v1277
        %1283 = vrot.lane.b32.xlu0 %v1241, 120
        %v1284 = vpop.permute.xlu0 %1283
        %1286 = vrot.lane.b32.xlu0 %v1241, 112
        %v1287 = vpop.permute.xlu0 %1286
        %1289 = vrot.lane.b32.xlu0 %v1241, 104
        %v1290 = vpop.permute.xlu0 %1289
        %1292 = vrot.lane.b32.xlu0 %v1241, 8
        %v1293 = vpop.permute.xlu0 %1292
        %1294 = vrot.lane.b32.xlu0 %v1284, 8
        %v1295 = vpop.permute.xlu0 %1294
        %1296 = vrot.lane.b32.xlu0 %v1287, 8
        %v1297 = vpop.permute.xlu0 %1296
        %1298 = vrot.lane.b32.xlu0 %v1290, 8
        %v1299 = vpop.permute.xlu0 %1298
        %v1304 = vsel %vm1273, %v1241, %v1293
        %v1305 = vsel %vm1273, %v1284, %v1295
        %v1306 = vsel %vm1273, %v1287, %v1297
        %v1307 = vsel %vm1273, %v1290, %v1299
        %v1308 = vpack.c.bf16 %v1304, %v1304
        %v1309 = vpack.c.bf16 %v1305, %v1305
        %v1310 = vpack.c.bf16 %v1306, %v1306
        %v1311 = vpack.c.bf16 %v1307, %v1307
        %1313 = vrot.lane.b32.xlu0 %v1077, 120
        %v1314 = vpop.permute.xlu0 %1313
        %1316 = vrot.lane.b32.xlu0 %v1077, 112
        %v1317 = vpop.permute.xlu0 %1316
        %1319 = vrot.lane.b32.xlu0 %v1077, 104
        %v1320 = vpop.permute.xlu0 %1319
        %v1322 = vpack.c.bf16 %v1077, %v1077
        %v1323 = vpack.c.bf16 %v1314, %v1314
        %v1324 = vpack.c.bf16 %v1317, %v1317
        %v1325 = vpack.c.bf16 %v1320, %v1320
        %vm1326 = vcmask 130048
        %v1328 = vsel %vm1326, %v1278, 0
        %v1331 = vsel %vm1326, %v1308, 0
        %1333 = vmatprep.subr.bf16.mxu0 0
        %1334 = vmatpush1.bf16.xpose.msra.mxu0 %v1331
        %1335 = vmatprep.subr.bf16.mxu0 0
        %1336 = vmatpush1.bf16.xpose.msra.mxu0 0
        %1337 = vmatprep.subr.bf16.mxu0 0
        %1338 = vmatpush1.bf16.xpose.msra.mxu0 0
        %1339 = vmatprep.subr.bf16.mxu0 0
        %1340 = vmatpush1.bf16.xpose.msra.mxu0 0
        %1341 = vmatprep.subr.bf16.mxu0 0
        %1342 = vmatpush1.bf16.xpose.msra.mxu0 0
        %1343 = vmatprep.subr.bf16.mxu0 0
        %1344 = vmatpush1.bf16.xpose.msra.mxu0 0
        %1345 = vmatprep.subr.bf16.mxu0 0
        %1346 = vmatpush1.bf16.xpose.msra.mxu0 0
        %1347 = vmatprep.subr.bf16.mxu0 0
        %1348 = vmatpush1.bf16.xpose.msra.mxu0 0
        %1349 = vmatprep.subr.bf16.mxu0 0
        %1350 = vmatpush1.bf16.xpose.msra.mxu0 0
        %1351 = vmatprep.subr.bf16.mxu0 0
        %1352 = vmatpush1.bf16.xpose.msra.mxu0 0
        %1353 = vmatprep.subr.bf16.mxu0 0
        %1354 = vmatpush1.bf16.xpose.msra.mxu0 0
        %1355 = vmatprep.subr.bf16.mxu0 0
        %1356 = vmatpush1.bf16.xpose.msra.mxu0 0
        %1357 = vmatprep.subr.bf16.mxu0 0
        %1358 = vmatpush1.bf16.xpose.msra.mxu0 0
        %1359 = vmatprep.subr.bf16.mxu0 0
        %1360 = vmatpush1.bf16.xpose.msra.mxu0 0
        %1361 = vmatprep.subr.bf16.mxu0 0
        %1362 = vmatpush1.bf16.xpose.msra.mxu0 0
        %1363 = vmatprep.subr.bf16.mxu0 0
        %1364 = vmatpush1.bf16.xpose.msra.mxu0 0
        %1365 = vmatprep.mubr.bf16.mxu0 0
        %1366 = vmatmul.mubr.bf16.gmra.mrb[0].mxu0 %v1328
        %v1367 = vpop.f32.mrb[0].mxu0
        %v1368 = vadd.f32 0.0, %v1367
        %v1369 = vpop.f32.mrb[0].mxu0
        %v1370 = vpop.f32.mrb[0].mxu0
        %v1371 = vpop.f32.mrb[0].mxu0
        %1372 = vdwg.mxu0
        %v1374 = vsel %vm1326, %v1279, 0
        %v1377 = vsel %vm1326, %v1309, 0
        %1379 = vmatprep.subr.bf16.mxu0 0
        %1380 = vmatpush1.bf16.xpose.msra.mxu0 %v1377
        %1381 = vmatprep.subr.bf16.mxu0 0
        %1382 = vmatpush1.bf16.xpose.msra.mxu0 0
        %1383 = vmatprep.subr.bf16.mxu0 0
        %1384 = vmatpush1.bf16.xpose.msra.mxu0 0
        %1385 = vmatprep.subr.bf16.mxu0 0
        %1386 = vmatpush1.bf16.xpose.msra.mxu0 0
        %1387 = vmatprep.subr.bf16.mxu0 0
        %1388 = vmatpush1.bf16.xpose.msra.mxu0 0
        %1389 = vmatprep.subr.bf16.mxu0 0
        %1390 = vmatpush1.bf16.xpose.msra.mxu0 0
        %1391 = vmatprep.subr.bf16.mxu0 0
        %1392 = vmatpush1.bf16.xpose.msra.mxu0 0
        %1393 = vmatprep.subr.bf16.mxu0 0
        %1394 = vmatpush1.bf16.xpose.msra.mxu0 0
        %1395 = vmatprep.subr.bf16.mxu0 0
        %1396 = vmatpush1.bf16.xpose.msra.mxu0 0
        %1397 = vmatprep.subr.bf16.mxu0 0
        %1398 = vmatpush1.bf16.xpose.msra.mxu0 0
        %1399 = vmatprep.subr.bf16.mxu0 0
        %1400 = vmatpush1.bf16.xpose.msra.mxu0 0
        %1401 = vmatprep.subr.bf16.mxu0 0
        %1402 = vmatpush1.bf16.xpose.msra.mxu0 0
        %1403 = vmatprep.subr.bf16.mxu0 0
        %1404 = vmatpush1.bf16.xpose.msra.mxu0 0
        %1405 = vmatprep.subr.bf16.mxu0 0
        %1406 = vmatpush1.bf16.xpose.msra.mxu0 0
        %1407 = vmatprep.subr.bf16.mxu0 0
        %1408 = vmatpush1.bf16.xpose.msra.mxu0 0
        %1409 = vmatprep.subr.bf16.mxu0 0
        %1410 = vmatpush1.bf16.xpose.msra.mxu0 0
        %1411 = vmatprep.mubr.bf16.mxu0 0
        %1412 = vmatmul.mubr.bf16.gmra.mrb[0].mxu0 %v1374
        %v1413 = vpop.f32.mrb[0].mxu0
        %v1414 = vadd.f32 0.0, %v1413
        %v1415 = vpop.f32.mrb[0].mxu0
        %v1416 = vpop.f32.mrb[0].mxu0
        %v1417 = vpop.f32.mrb[0].mxu0
        %1418 = vdwg.mxu0
        %v1420 = vsel %vm1326, %v1280, 0
        %v1423 = vsel %vm1326, %v1310, 0
        %1425 = vmatprep.subr.bf16.mxu0 0
        %1426 = vmatpush1.bf16.xpose.msra.mxu0 %v1423
        %1427 = vmatprep.subr.bf16.mxu0 0
        %1428 = vmatpush1.bf16.xpose.msra.mxu0 0
        %1429 = vmatprep.subr.bf16.mxu0 0
        %1430 = vmatpush1.bf16.xpose.msra.mxu0 0
        %1431 = vmatprep.subr.bf16.mxu0 0
        %1432 = vmatpush1.bf16.xpose.msra.mxu0 0
        %1433 = vmatprep.subr.bf16.mxu0 0
        %1434 = vmatpush1.bf16.xpose.msra.mxu0 0
        %1435 = vmatprep.subr.bf16.mxu0 0
        %1436 = vmatpush1.bf16.xpose.msra.mxu0 0
        %1437 = vmatprep.subr.bf16.mxu0 0
        %1438 = vmatpush1.bf16.xpose.msra.mxu0 0
        %1439 = vmatprep.subr.bf16.mxu0 0
        %1440 = vmatpush1.bf16.xpose.msra.mxu0 0
        %1441 = vmatprep.subr.bf16.mxu0 0
        %1442 = vmatpush1.bf16.xpose.msra.mxu0 0
        %1443 = vmatprep.subr.bf16.mxu0 0
        %1444 = vmatpush1.bf16.xpose.msra.mxu0 0
        %1445 = vmatprep.subr.bf16.mxu0 0
        %1446 = vmatpush1.bf16.xpose.msra.mxu0 0
        %1447 = vmatprep.subr.bf16.mxu0 0
        %1448 = vmatpush1.bf16.xpose.msra.mxu0 0
        %1449 = vmatprep.subr.bf16.mxu0 0
        %1450 = vmatpush1.bf16.xpose.msra.mxu0 0
        %1451 = vmatprep.subr.bf16.mxu0 0
        %1452 = vmatpush1.bf16.xpose.msra.mxu0 0
        %1453 = vmatprep.subr.bf16.mxu0 0
        %1454 = vmatpush1.bf16.xpose.msra.mxu0 0
        %1455 = vmatprep.subr.bf16.mxu0 0
        %1456 = vmatpush1.bf16.xpose.msra.mxu0 0
        %1457 = vmatprep.mubr.bf16.mxu0 0
        %1458 = vmatmul.mubr.bf16.gmra.mrb[0].mxu0 %v1420
        %v1459 = vpop.f32.mrb[0].mxu0
        %v1460 = vadd.f32 0.0, %v1459
        %v1461 = vpop.f32.mrb[0].mxu0
        %v1462 = vpop.f32.mrb[0].mxu0
        %v1463 = vpop.f32.mrb[0].mxu0
        %1464 = vdwg.mxu0
        %v1466 = vsel %vm1326, %v1281, 0
        %v1469 = vsel %vm1326, %v1311, 0
        %1471 = vmatprep.subr.bf16.mxu0 0
        %1472 = vmatpush1.bf16.xpose.msra.mxu0 %v1469
        %1473 = vmatprep.subr.bf16.mxu0 0
        %1474 = vmatpush1.bf16.xpose.msra.mxu0 0
        %1475 = vmatprep.subr.bf16.mxu0 0
        %1476 = vmatpush1.bf16.xpose.msra.mxu0 0
        %1477 = vmatprep.subr.bf16.mxu0 0
        %1478 = vmatpush1.bf16.xpose.msra.mxu0 0
        %1479 = vmatprep.subr.bf16.mxu0 0
        %1480 = vmatpush1.bf16.xpose.msra.mxu0 0
        %1481 = vmatprep.subr.bf16.mxu0 0
        %1482 = vmatpush1.bf16.xpose.msra.mxu0 0
        %1483 = vmatprep.subr.bf16.mxu0 0
        %1484 = vmatpush1.bf16.xpose.msra.mxu0 0
        %1485 = vmatprep.subr.bf16.mxu0 0
        %1486 = vmatpush1.bf16.xpose.msra.mxu0 0
        %1487 = vmatprep.subr.bf16.mxu0 0
        %1488 = vmatpush1.bf16.xpose.msra.mxu0 0
        %1489 = vmatprep.subr.bf16.mxu0 0
        %1490 = vmatpush1.bf16.xpose.msra.mxu0 0
        %1491 = vmatprep.subr.bf16.mxu0 0
        %1492 = vmatpush1.bf16.xpose.msra.mxu0 0
        %1493 = vmatprep.subr.bf16.mxu0 0
        %1494 = vmatpush1.bf16.xpose.msra.mxu0 0
        %1495 = vmatprep.subr.bf16.mxu0 0
        %1496 = vmatpush1.bf16.xpose.msra.mxu0 0
        %1497 = vmatprep.subr.bf16.mxu0 0
        %1498 = vmatpush1.bf16.xpose.msra.mxu0 0
        %1499 = vmatprep.subr.bf16.mxu0 0
        %1500 = vmatpush1.bf16.xpose.msra.mxu0 0
        %1501 = vmatprep.subr.bf16.mxu0 0
        %1502 = vmatpush1.bf16.xpose.msra.mxu0 0
        %1503 = vmatprep.mubr.bf16.mxu0 0
        %1504 = vmatmul.mubr.bf16.gmra.mrb[0].mxu0 %v1466
        %v1505 = vpop.f32.mrb[0].mxu0
        %v1506 = vadd.f32 0.0, %v1505
        %v1507 = vpop.f32.mrb[0].mxu0
        %v1508 = vpop.f32.mrb[0].mxu0
        %v1509 = vpop.f32.mrb[0].mxu0
        %1510 = vdwg.mxu0
        %s1511 = smul.u32 %s47, 8
        %v1512 = vlaneseq
        %v1513 = vshrl.u32 %v1512, 7
        %v1514 = vstv %s1511
        %v1515 = vadd.s32 %v1514, %v1513
        %v1516 = vlaneseq
        %v1517 = vand.u32 %v1516, 127
        %vm1518 = vcmp.le.s32.totalorder %v1517, %v1515
        %v1519 = vsel %vm1518, 1, 0
        %vm1520 = vcmp.eq.s32.totalorder %v1519, 1
        %v1521 = vsel %vm1520, %v1368, -1.7014117e+38
        %v1522 = vsel %vm1520, %v1414, -1.7014117e+38
        %v1523 = vsel %vm1520, %v1460, -1.7014117e+38
        %v1524 = vsel %vm1520, %v1506, -1.7014117e+38
        %v1525 = vsel %vm1273, %v1521, -inf
        %1526 = vmax.xlane.f32.xlu0 %v1525
        %v1527 = vpop.xlane.xlu0 %1526
        %v1528 = vsel %vm1273, %v1522, -inf
        %1529 = vmax.xlane.f32.xlu0 %v1528
        %v1530 = vpop.xlane.xlu0 %1529
        %v1531 = vsel %vm1273, %v1523, -inf
        %1532 = vmax.xlane.f32.xlu0 %v1531
        %v1533 = vpop.xlane.xlu0 %1532
        %v1534 = vsel %vm1273, %v1524, -inf
        %1535 = vmax.xlane.f32.xlu0 %v1534
        %v1536 = vpop.xlane.xlu0 %1535
        %v1537 = vsub.f32 %v1521, %v1527
        %v1538 = vsub.f32 %v1522, %v1530
        %v1539 = vsub.f32 %v1523, %v1533
        %v1540 = vsub.f32 %v1524, %v1536
        %v1541 = vmul.f32 %v1537, 1.442695
        %v1542 = vpow.pop %v1541
        %v1543 = vmul.f32 %v1538, 1.442695
        %v1544 = vpow.pop %v1543
        %v1545 = vmul.f32 %v1539, 1.442695
        %v1546 = vpow.pop %v1545
        %v1547 = vmul.f32 %v1540, 1.442695
        %v1548 = vpow.pop %v1547
        %v1549 = vsel %vm1273, %v1542, 0.0
        %1550 = vadd.xlane.f32.xlu0 %v1549
        %v1551 = vpop.xlane.xlu0 %1550
        %v1552 = vsel %vm1273, %v1544, 0.0
        %1553 = vadd.xlane.f32.xlu0 %v1552
        %v1554 = vpop.xlane.xlu0 %1553
        %v1555 = vsel %vm1273, %v1546, 0.0
        %1556 = vadd.xlane.f32.xlu0 %v1555
        %v1557 = vpop.xlane.xlu0 %1556
        %v1558 = vsel %vm1273, %v1548, 0.0
        %1559 = vadd.xlane.f32.xlu0 %v1558
        %v1560 = vpop.xlane.xlu0 %1559
        %v1561 = vrcp.pop %v1551
        %v1562 = vrcp.pop %v1554
        %v1563 = vrcp.pop %v1557
        %v1564 = vrcp.pop %v1560
        %v1565 = vmul.f32 %v1542, %v1561
        %v1566 = vmul.f32 %v1544, %v1562
        %v1567 = vmul.f32 %v1546, %v1563
        %v1568 = vmul.f32 %v1548, %v1564
        %v1569 = vpack.c.bf16 %v1565, %v1565
        %v1570 = vpack.c.bf16 %v1566, %v1566
        %v1571 = vpack.c.bf16 %v1567, %v1567
        %v1572 = vpack.c.bf16 %v1568, %v1568
        %1574 = vrot.lane.b32.xlu0 %v1322, 96
        %v1575 = vpop.permute.xlu0 %1574
        %v1577 = vsel %vm1273, %v1569, 0
        %vm1579 = vcmask 1043456
        %v1581 = vsel %vm1579, %v1575, 0
        %1583 = vmatprep.subr.bf16.mxu0 0
        %1584 = vmatpush1.bf16.msra.mxu0 %v1581
        %1585 = vmatprep.subr.bf16.mxu0 0
        %1586 = vmatpush1.bf16.msra.mxu0 0
        %1587 = vmatprep.subr.bf16.mxu0 0
        %1588 = vmatpush1.bf16.msra.mxu0 0
        %1589 = vmatprep.subr.bf16.mxu0 0
        %1590 = vmatpush1.bf16.msra.mxu0 0
        %1591 = vmatprep.subr.bf16.mxu0 0
        %1592 = vmatpush1.bf16.msra.mxu0 0
        %1593 = vmatprep.subr.bf16.mxu0 0
        %1594 = vmatpush1.bf16.msra.mxu0 0
        %1595 = vmatprep.subr.bf16.mxu0 0
        %1596 = vmatpush1.bf16.msra.mxu0 0
        %1597 = vmatprep.subr.bf16.mxu0 0
        %1598 = vmatpush1.bf16.msra.mxu0 0
        %1599 = vmatprep.subr.bf16.mxu0 0
        %1600 = vmatpush1.bf16.msra.mxu0 0
        %1601 = vmatprep.subr.bf16.mxu0 0
        %1602 = vmatpush1.bf16.msra.mxu0 0
        %1603 = vmatprep.subr.bf16.mxu0 0
        %1604 = vmatpush1.bf16.msra.mxu0 0
        %1605 = vmatprep.subr.bf16.mxu0 0
        %1606 = vmatpush1.bf16.msra.mxu0 0
        %1607 = vmatprep.subr.bf16.mxu0 0
        %1608 = vmatpush1.bf16.msra.mxu0 0
        %1609 = vmatprep.subr.bf16.mxu0 0
        %1610 = vmatpush1.bf16.msra.mxu0 0
        %1611 = vmatprep.subr.bf16.mxu0 0
        %1612 = vmatpush1.bf16.msra.mxu0 0
        %1613 = vmatprep.subr.bf16.mxu0 0
        %1614 = vmatpush1.bf16.msra.mxu0 0
        %1615 = vmatprep.mubr.bf16.mxu0 0
        %1616 = vmatmul.mubr.bf16.gmra.mrb[0].mxu0 %v1577
        %v1617 = vpop.f32.mrb[0].mxu0
        %v1618 = vadd.f32 0.0, %v1617
        %v1619 = vpop.f32.mrb[0].mxu0
        %v1620 = vpop.f32.mrb[0].mxu0
        %v1621 = vpop.f32.mrb[0].mxu0
        %1622 = vdwg.mxu0
        %1624 = vrot.lane.b32.xlu0 %v1323, 96
        %v1625 = vpop.permute.xlu0 %1624
        %v1627 = vsel %vm1273, %v1570, 0
        %v1630 = vsel %vm1579, %v1625, 0
        %1632 = vmatprep.subr.bf16.mxu0 0
        %1633 = vmatpush1.bf16.msra.mxu0 %v1630
        %1634 = vmatprep.subr.bf16.mxu0 0
        %1635 = vmatpush1.bf16.msra.mxu0 0
        %1636 = vmatprep.subr.bf16.mxu0 0
        %1637 = vmatpush1.bf16.msra.mxu0 0
        %1638 = vmatprep.subr.bf16.mxu0 0
        %1639 = vmatpush1.bf16.msra.mxu0 0
        %1640 = vmatprep.subr.bf16.mxu0 0
        %1641 = vmatpush1.bf16.msra.mxu0 0
        %1642 = vmatprep.subr.bf16.mxu0 0
        %1643 = vmatpush1.bf16.msra.mxu0 0
        %1644 = vmatprep.subr.bf16.mxu0 0
        %1645 = vmatpush1.bf16.msra.mxu0 0
        %1646 = vmatprep.subr.bf16.mxu0 0
        %1647 = vmatpush1.bf16.msra.mxu0 0
        %1648 = vmatprep.subr.bf16.mxu0 0
        %1649 = vmatpush1.bf16.msra.mxu0 0
        %1650 = vmatprep.subr.bf16.mxu0 0
        %1651 = vmatpush1.bf16.msra.mxu0 0
        %1652 = vmatprep.subr.bf16.mxu0 0
        %1653 = vmatpush1.bf16.msra.mxu0 0
        %1654 = vmatprep.subr.bf16.mxu0 0
        %1655 = vmatpush1.bf16.msra.mxu0 0
        %1656 = vmatprep.subr.bf16.mxu0 0
        %1657 = vmatpush1.bf16.msra.mxu0 0
        %1658 = vmatprep.subr.bf16.mxu0 0
        %1659 = vmatpush1.bf16.msra.mxu0 0
        %1660 = vmatprep.subr.bf16.mxu0 0
        %1661 = vmatpush1.bf16.msra.mxu0 0
        %1662 = vmatprep.subr.bf16.mxu0 0
        %1663 = vmatpush1.bf16.msra.mxu0 0
        %1664 = vmatprep.mubr.bf16.mxu0 0
        %1665 = vmatmul.mubr.bf16.gmra.mrb[0].mxu0 %v1627
        %v1666 = vpop.f32.mrb[0].mxu0
        %v1667 = vadd.f32 0.0, %v1666
        %v1668 = vpop.f32.mrb[0].mxu0
        %v1669 = vpop.f32.mrb[0].mxu0
        %v1670 = vpop.f32.mrb[0].mxu0
        %1671 = vdwg.mxu0
        %1673 = vrot.lane.b32.xlu0 %v1324, 96
        %v1674 = vpop.permute.xlu0 %1673
        %v1676 = vsel %vm1273, %v1571, 0
        %v1679 = vsel %vm1579, %v1674, 0
        %1681 = vmatprep.subr.bf16.mxu0 0
        %1682 = vmatpush1.bf16.msra.mxu0 %v1679
        %1683 = vmatprep.subr.bf16.mxu0 0
        %1684 = vmatpush1.bf16.msra.mxu0 0
        %1685 = vmatprep.subr.bf16.mxu0 0
        %1686 = vmatpush1.bf16.msra.mxu0 0
        %1687 = vmatprep.subr.bf16.mxu0 0
        %1688 = vmatpush1.bf16.msra.mxu0 0
        %1689 = vmatprep.subr.bf16.mxu0 0
        %1690 = vmatpush1.bf16.msra.mxu0 0
        %1691 = vmatprep.subr.bf16.mxu0 0
        %1692 = vmatpush1.bf16.msra.mxu0 0
        %1693 = vmatprep.subr.bf16.mxu0 0
        %1694 = vmatpush1.bf16.msra.mxu0 0
        %1695 = vmatprep.subr.bf16.mxu0 0
        %1696 = vmatpush1.bf16.msra.mxu0 0
        %1697 = vmatprep.subr.bf16.mxu0 0
        %1698 = vmatpush1.bf16.msra.mxu0 0
        %1699 = vmatprep.subr.bf16.mxu0 0
        %1700 = vmatpush1.bf16.msra.mxu0 0
        %1701 = vmatprep.subr.bf16.mxu0 0
        %1702 = vmatpush1.bf16.msra.mxu0 0
        %1703 = vmatprep.subr.bf16.mxu0 0
        %1704 = vmatpush1.bf16.msra.mxu0 0
        %1705 = vmatprep.subr.bf16.mxu0 0
        %1706 = vmatpush1.bf16.msra.mxu0 0
        %1707 = vmatprep.subr.bf16.mxu0 0
        %1708 = vmatpush1.bf16.msra.mxu0 0
        %1709 = vmatprep.subr.bf16.mxu0 0
        %1710 = vmatpush1.bf16.msra.mxu0 0
        %1711 = vmatprep.subr.bf16.mxu0 0
        %1712 = vmatpush1.bf16.msra.mxu0 0
        %1713 = vmatprep.mubr.bf16.mxu0 0
        %1714 = vmatmul.mubr.bf16.gmra.mrb[0].mxu0 %v1676
        %v1715 = vpop.f32.mrb[0].mxu0
        %v1716 = vadd.f32 0.0, %v1715
        %v1717 = vpop.f32.mrb[0].mxu0
        %v1718 = vpop.f32.mrb[0].mxu0
        %v1719 = vpop.f32.mrb[0].mxu0
        %1720 = vdwg.mxu0
        %1722 = vrot.lane.b32.xlu0 %v1325, 96
        %v1723 = vpop.permute.xlu0 %1722
        %v1725 = vsel %vm1273, %v1572, 0
        %v1728 = vsel %vm1579, %v1723, 0
        %1730 = vmatprep.subr.bf16.mxu0 0
        %1731 = vmatpush1.bf16.msra.mxu0 %v1728
        %1732 = vmatprep.subr.bf16.mxu0 0
        %1733 = vmatpush1.bf16.msra.mxu0 0
        %1734 = vmatprep.subr.bf16.mxu0 0
        %1735 = vmatpush1.bf16.msra.mxu0 0
        %1736 = vmatprep.subr.bf16.mxu0 0
        %1737 = vmatpush1.bf16.msra.mxu0 0
        %1738 = vmatprep.subr.bf16.mxu0 0
        %1739 = vmatpush1.bf16.msra.mxu0 0
        %1740 = vmatprep.subr.bf16.mxu0 0
        %1741 = vmatpush1.bf16.msra.mxu0 0
        %1742 = vmatprep.subr.bf16.mxu0 0
        %1743 = vmatpush1.bf16.msra.mxu0 0
        %1744 = vmatprep.subr.bf16.mxu0 0
        %1745 = vmatpush1.bf16.msra.mxu0 0
        %1746 = vmatprep.subr.bf16.mxu0 0
        %1747 = vmatpush1.bf16.msra.mxu0 0
        %1748 = vmatprep.subr.bf16.mxu0 0
        %1749 = vmatpush1.bf16.msra.mxu0 0
        %1750 = vmatprep.subr.bf16.mxu0 0
        %1751 = vmatpush1.bf16.msra.mxu0 0
        %1752 = vmatprep.subr.bf16.mxu0 0
        %1753 = vmatpush1.bf16.msra.mxu0 0
        %1754 = vmatprep.subr.bf16.mxu0 0
        %1755 = vmatpush1.bf16.msra.mxu0 0
        %1756 = vmatprep.subr.bf16.mxu0 0
        %1757 = vmatpush1.bf16.msra.mxu0 0
        %1758 = vmatprep.subr.bf16.mxu0 0
        %1759 = vmatpush1.bf16.msra.mxu0 0
        %1760 = vmatprep.subr.bf16.mxu0 0
        %1761 = vmatpush1.bf16.msra.mxu0 0
        %1762 = vmatprep.mubr.bf16.mxu0 0
        %1763 = vmatmul.mubr.bf16.gmra.mrb[0].mxu0 %v1725
        %v1764 = vpop.f32.mrb[0].mxu0
        %v1765 = vadd.f32 0.0, %v1764
        %v1766 = vpop.f32.mrb[0].mxu0
        %v1767 = vpop.f32.mrb[0].mxu0
        %v1768 = vpop.f32.mrb[0].mxu0
        %1769 = vdwg.mxu0
        %1771 = vrot.lane.b32.xlu0 %v1667, 8
        %v1772 = vpop.permute.xlu0 %1771
        %1775 = vrot.lane.b32.xlu0 %v1716, 16
        %v1776 = vpop.permute.xlu0 %1775
        %1779 = vrot.lane.b32.xlu0 %v1765, 24
        %v1780 = vpop.permute.xlu0 %1779
        %v1782 = vsel %vm1273, %v1618, %v1772
        %v1783 = vsel %vm1326, %v1782, %v1776
        %vm1784 = vcmask 195584
        %v1785 = vsel %vm1784, %v1783, %v1780
        %v1786 = vpack.c.bf16 %v1785, %v1785
        %v1787 = vld [vmem:[#allocation19] sm:$0xf]
        %v1788 = vld [vmem:[#allocation19 + $0x4] sm:$0xf]
        %v1789 = vld [vmem:[#allocation19 + $0x8] sm:$0xf]
        %v1790 = vld [vmem:[#allocation19 + $0xc] sm:$0xf]
        %v1795 = vunpack.c.l.b16 %v1787
        %v1796 = vunpack.c.l.b16 %v1788
        %v1797 = vunpack.c.l.b16 %v1789
        %v1798 = vunpack.c.l.b16 %v1790
        %v1799 = vpack.c.b16 %v1796, %v1795
        %v1800 = vpack.c.b16 %v1798, %v1797
        %v1804 = vsel %vm877, %v1786, 0
        %1806 = vmatprep.subr.bf16.mxu0 0
        %1807 = vmatpush1.bf16.msra.mxu0 %v1799
        %1808 = vmatprep.subr.bf16.mxu0 0
        %1809 = vmatpush1.bf16.msra.mxu0 %v1800
        %1810 = vmatprep.subr.bf16.mxu0 0
        %1811 = vmatpush1.bf16.msra.mxu0 0
        %1812 = vmatprep.subr.bf16.mxu0 0
        %1813 = vmatpush1.bf16.msra.mxu0 0
        %1814 = vmatprep.subr.bf16.mxu0 0
        %1815 = vmatpush1.bf16.msra.mxu0 0
        %1816 = vmatprep.subr.bf16.mxu0 0
        %1817 = vmatpush1.bf16.msra.mxu0 0
        %1818 = vmatprep.subr.bf16.mxu0 0
        %1819 = vmatpush1.bf16.msra.mxu0 0
        %1820 = vmatprep.subr.bf16.mxu0 0
        %1821 = vmatpush1.bf16.msra.mxu0 0
        %1822 = vmatprep.subr.bf16.mxu0 0
        %1823 = vmatpush1.bf16.msra.mxu0 0
        %1824 = vmatprep.subr.bf16.mxu0 0
        %1825 = vmatpush1.bf16.msra.mxu0 0
        %1826 = vmatprep.subr.bf16.mxu0 0
        %1827 = vmatpush1.bf16.msra.mxu0 0
        %1828 = vmatprep.subr.bf16.mxu0 0
        %1829 = vmatpush1.bf16.msra.mxu0 0
        %1830 = vmatprep.subr.bf16.mxu0 0
        %1831 = vmatpush1.bf16.msra.mxu0 0
        %1832 = vmatprep.subr.bf16.mxu0 0
        %1833 = vmatpush1.bf16.msra.mxu0 0
        %1834 = vmatprep.subr.bf16.mxu0 0
        %1835 = vmatpush1.bf16.msra.mxu0 0
        %1836 = vmatprep.subr.bf16.mxu0 0
        %1837 = vmatpush1.bf16.msra.mxu0 0
        %1838 = vmatprep.mubr.bf16.mxu0 0
        %1839 = vmatmul.mubr.bf16.gmra.mrb[0].mxu0 %v1804
        %v1840 = vpop.f32.mrb[0].mxu0
        %v1841 = vadd.f32 0.0, %v1840
        %v1842 = vpop.f32.mrb[0].mxu0
        %v1843 = vpop.f32.mrb[0].mxu0
        %v1844 = vpop.f32.mrb[0].mxu0
        %1845 = vdwg.mxu0
        %v1846 = vadd.f32 %v871, %v1841
        %v1847 = vld [vmem:[#allocation20] sm:$0x1]
        %v1848 = vmul.f32 %v1846, %v1846
        %v1849 = vsel %vm877, %v1848, 0.0
        %1850 = vadd.xlane.f32.xlu0 %v1849
        %v1851 = vpop.xlane.xlu0 %1850
        %v1852 = vmul.f32 %v1851, %v881
        %v1853 = vadd.f32 %v1852, 1e-06
        %v1854 = vrsqrt.pop %v1853
        %v1855 = vmul.f32 %v1846, %v1854
        %v1857 = vlaneseq
        %v1858 = vshrl.u32 %v1857, 7
        %v1859 = vsub.s32 0, %v1858
        %v1860 = vrot.slane %v1847, %v1859
        %v1862 = vmul.f32 %v1855, %v1860
        %v1863 = vpack.c.bf16 %v1862, %v1862
        %v1864 = vld [vmem:[%s17] sm:$0xf]
        %v1865 = vld [vmem:[%s17 + $0x4] sm:$0xf]
        %v1866 = vld [vmem:[%s17 + $0x8] sm:$0xf]
        %v1867 = vld [vmem:[%s17 + $0xc] sm:$0xf]
        %v1872 = vunpack.c.l.b16 %v1864
        %v1873 = vunpack.c.l.b16 %v1865
        %v1874 = vunpack.c.l.b16 %v1866
        %v1875 = vunpack.c.l.b16 %v1867
        %v1876 = vpack.c.b16 %v1873, %v1872
        %v1877 = vpack.c.b16 %v1875, %v1874
        %v1881 = vsel %vm877, %v1863, 0
        %1883 = vmatprep.subr.bf16.mxu0 0
        %1884 = vmatpush1.bf16.msra.mxu0 %v1876
        %1885 = vmatprep.subr.bf16.mxu0 0
        %1886 = vmatpush1.bf16.msra.mxu0 %v1877
        %1887 = vmatprep.subr.bf16.mxu0 0
        %1888 = vmatpush1.bf16.msra.mxu0 0
        %1889 = vmatprep.subr.bf16.mxu0 0
        %1890 = vmatpush1.bf16.msra.mxu0 0
        %1891 = vmatprep.subr.bf16.mxu0 0
        %1892 = vmatpush1.bf16.msra.mxu0 0
        %1893 = vmatprep.subr.bf16.mxu0 0
        %1894 = vmatpush1.bf16.msra.mxu0 0
        %1895 = vmatprep.subr.bf16.mxu0 0
        %1896 = vmatpush1.bf16.msra.mxu0 0
        %1897 = vmatprep.subr.bf16.mxu0 0
        %1898 = vmatpush1.bf16.msra.mxu0 0
        %1899 = vmatprep.subr.bf16.mxu0 0
        %1900 = vmatpush1.bf16.msra.mxu0 0
        %1901 = vmatprep.subr.bf16.mxu0 0
        %1902 = vmatpush1.bf16.msra.mxu0 0
        %1903 = vmatprep.subr.bf16.mxu0 0
        %1904 = vmatpush1.bf16.msra.mxu0 0
        %1905 = vmatprep.subr.bf16.mxu0 0
        %1906 = vmatpush1.bf16.msra.mxu0 0
        %1907 = vmatprep.subr.bf16.mxu0 0
        %1908 = vmatpush1.bf16.msra.mxu0 0
        %1909 = vmatprep.subr.bf16.mxu0 0
        %1910 = vmatpush1.bf16.msra.mxu0 0
        %1911 = vmatprep.subr.bf16.mxu0 0
        %1912 = vmatpush1.bf16.msra.mxu0 0
        %1913 = vmatprep.subr.bf16.mxu0 0
        %1914 = vmatpush1.bf16.msra.mxu0 0
        %1915 = vmatprep.mubr.bf16.mxu0 0
        %1916 = vmatmul.mubr.bf16.gmra.mrb[0].mxu0 %v1881
        %v1917 = vpop.f32.mrb[0].mxu0
        %v1918 = vadd.f32 0.0, %v1917
        %v1919 = vpop.f32.mrb[0].mxu0
        %v1920 = vpop.f32.mrb[0].mxu0
        %v1921 = vpop.f32.mrb[0].mxu0
        %1922 = vdwg.mxu0
        %v1923 = vxor.u32 %v1918, 2147483648
        %v1924 = vmul.f32 %v1923, 1.442695
        %v1925 = vpow.pop %v1924
        %v1926 = vadd.f32 %v1925, 1.0
        %v1927 = vrcp.pop %v1926
        %v1928 = vmul.f32 1.0, %v1927
        %v1929 = vmul.f32 %v1918, %v1928
        %1931 = vrot.lane.b32.xlu0 %v1918, 64
        %v1932 = vpop.permute.xlu0 %1931
        %v1934 = vmul.f32 %v1929, %v1932
        %v1935 = vpack.c.bf16 %v1934, %v1934
        %v1936 = vld [vmem:[%s18] sm:$0xf]
        %v1937 = vld [vmem:[%s18 + $0x4] sm:$0xf]
        %v1938 = vld [vmem:[%s18 + $0x8] sm:$0xf]
        %v1939 = vld [vmem:[%s18 + $0xc] sm:$0xf]
        %v1940 = vld [vmem:[%s18 + $0x10] sm:$0xf]
        %v1941 = vld [vmem:[%s18 + $0x14] sm:$0xf]
        %v1942 = vld [vmem:[%s18 + $0x18] sm:$0xf]
        %v1943 = vld [vmem:[%s18 + $0x1c] sm:$0xf]
        %v1952 = vunpack.c.l.b16 %v1936
        %v1953 = vunpack.c.l.b16 %v1937
        %v1954 = vunpack.c.l.b16 %v1938
        %v1955 = vunpack.c.l.b16 %v1939
        %v1956 = vunpack.c.l.b16 %v1940
        %v1957 = vunpack.c.l.b16 %v1941
        %v1958 = vunpack.c.l.b16 %v1942
        %v1959 = vunpack.c.l.b16 %v1943
        %v1960 = vpack.c.b16 %v1953, %v1952
        %v1961 = vpack.c.b16 %v1955, %v1954
        %v1962 = vpack.c.b16 %v1957, %v1956
        %v1963 = vpack.c.b16 %v1959, %v1958
        %vm1968 = vcmask 523264
        %v1970 = vsel %vm1968, %v1935, 0
        %1972 = vmatprep.subr.bf16.mxu0 0
        %1973 = vmatpush1.bf16.msra.mxu0 %v1960
        %1974 = vmatprep.subr.bf16.mxu0 0
        %1975 = vmatpush1.bf16.msra.mxu0 %v1961
        %1976 = vmatprep.subr.bf16.mxu0 0
        %1977 = vmatpush1.bf16.msra.mxu0 %v1962
        %1978 = vmatprep.subr.bf16.mxu0 0
        %1979 = vmatpush1.bf16.msra.mxu0 %v1963
        %1980 = vmatprep.subr.bf16.mxu0 0
        %1981 = vmatpush1.bf16.msra.mxu0 0
        %1982 = vmatprep.subr.bf16.mxu0 0
        %1983 = vmatpush1.bf16.msra.mxu0 0
        %1984 = vmatprep.subr.bf16.mxu0 0
        %1985 = vmatpush1.bf16.msra.mxu0 0
        %1986 = vmatprep.subr.bf16.mxu0 0
        %1987 = vmatpush1.bf16.msra.mxu0 0
        %1988 = vmatprep.subr.bf16.mxu0 0
        %1989 = vmatpush1.bf16.msra.mxu0 0
        %1990 = vmatprep.subr.bf16.mxu0 0
        %1991 = vmatpush1.bf16.msra.mxu0 0
        %1992 = vmatprep.subr.bf16.mxu0 0
        %1993 = vmatpush1.bf16.msra.mxu0 0
        %1994 = vmatprep.subr.bf16.mxu0 0
        %1995 = vmatpush1.bf16.msra.mxu0 0
        %1996 = vmatprep.subr.bf16.mxu0 0
        %1997 = vmatpush1.bf16.msra.mxu0 0
        %1998 = vmatprep.subr.bf16.mxu0 0
        %1999 = vmatpush1.bf16.msra.mxu0 0
        %2000 = vmatprep.subr.bf16.mxu0 0
        %2001 = vmatpush1.bf16.msra.mxu0 0
        %2002 = vmatprep.subr.bf16.mxu0 0
        %2003 = vmatpush1.bf16.msra.mxu0 0
        %2004 = vmatprep.mubr.bf16.mxu0 0
        %2005 = vmatmul.mubr.bf16.gmra.mrb[0].mxu0 %v1970
        %v2006 = vpop.f32.mrb[0].mxu0
        %v2007 = vadd.f32 0.0, %v2006
        %v2008 = vpop.f32.mrb[0].mxu0
        %v2009 = vpop.f32.mrb[0].mxu0
        %v2010 = vpop.f32.mrb[0].mxu0
        %2011 = vdwg.mxu0
        %v2012 = vadd.f32 %v1846, %v2007
        %2013 = vst.msk [vmem:[%s851] sm:$0xff] %vm877, %v2012
        %s2014 = sand.u32 %s502, 1
        %s2015 = scalar_lea.sflag [#allocation4], %s2014
        %s2016 = sand.u32 %s502, 1
        %s2017 = smul.addr %s2016, 8
        %s2018 = scalar_lea.vmem [#allocation22], %s2017
        // Predicated region
        $region145: #{tpu_custom_call.1} parent=95 // pred_check
          %p2019 = pneg %p512
        $region146: #{tpu_custom_call.1} parent=95 // pred_check_branch
          %2021 = sbr.rel (%p2019) target = $region148
        $region147: #{tpu_custom_call.1} parent=95 // pred_region
          %s2023 = ssub.s32 128, 128
          %2024 = vsyncadd %s2015, %s2023
          %s2025 = sadd.s32 %s47, %s46
          %s2026 = smul.addr %s2025, 128
          %s2027 = scalar_lea.hbm %s19, %s2026
          %s2029 = sshll.u32 %s2018, 4
          %s2030 = int_to_ptr.vmem [resolvable:$true] %s2029
          %2032 = dma.vmem_to_hbm [thread:$0]  %s2030, 128, %s2027, %s2015
        $region148: #{tpu_custom_call.1} parent=95 // pred_fallthru
          _
      $region96: #{tpu_custom_call.1} parent=5 // pred_fallthru
        _
      %p2033 = scmp.le.s32.totalorder 2, %s37
      // Predicated region
      $region149: #{tpu_custom_call.1} parent=5 // pred_check
        %p2034 = pneg %p2033
      $region150: #{tpu_custom_call.1} parent=5 // pred_check_branch
        %2036 = sbr.rel (%p2034) target = $region152
      $region151: #{tpu_custom_call.1} parent=5 // pred_region
        %s2037 = ssub.s32 %s37, 2
        // Predicated region
        $region153: #{tpu_custom_call.1} parent=151 // pred_check
          %p2038 = pneg %p518
        $region154: #{tpu_custom_call.1} parent=151 // pred_check_branch
          %2040 = sbr.rel (%p2038) target = $region156
        $region155: #{tpu_custom_call.1} parent=151 // pred_region
          %s2041 = sand.u32 %s503, 1
          %s2042 = scalar_lea.sflag [#allocation4], %s2041
          %s2043 = sand.u32 %s503, 1
          %s2044 = smul.addr %s2043, 8
          %s2045 = scalar_lea.vmem [#allocation22], %s2044
          %2046 = dma.done %s2042, 128
        $region156: #{tpu_custom_call.1} parent=151 // pred_fallthru
          _
      $region152: #{tpu_custom_call.1} parent=5 // pred_fallthru
        _
    $region6: #{tpu_custom_call.1} parent=1 // loop_footer
      %s41 = sadd.s32 1, %s37
    $region7: #{tpu_custom_call.1} parent=1 // loop_footer_branch
      %36 = sbr.rel target = $region3
    $region8: #{tpu_custom_call.1} parent=1 // loop_exit
      _
    %2047 = vsyncpa [#allocation3], 1
    %s2048 = scalar_lea.sflag [#allocation3], 1
    %2049 = vsyncpa %s2048, 1
    %2050 = vsyncpa [#allocation6], 1
    %2051 = vsyncpa [#allocation9], 1
    %2052 = vsyncpa [#allocation12], 1
    %2053 = vsyncpa [#allocation15], 1
    %2054 = vsyncpa [#allocation18], 1
    %2055 = vsyncpa [#allocation21], 1
    %2056 = vsyncpa [#allocation4], 1
    %s2057 = scalar_lea.sflag [#allocation4], 1
    %2058 = vsyncpa %s2057, 1

</llo_original>
